<compile_context>
chip_gen: v5e
topology: v5e:2x2
jax: 0.10.0
libtpu: 0.0.40
codegen_flags: <defaults>
</compile_context>

<pallas_src>
import functools

import jax
import jax.numpy as jnp
from jax.experimental import pallas as pl
from jax.experimental.pallas import tpu as pltpu


def _se_resblock_kernel(x_ref, w1t_ref, w2s_ref, w3bd_ref, se0t_ref, se1t_ref,
                        bias_ref, out_ref, *, Cmid, Cout, Cr, offs, inv_area):
    """One batch tile: x_ref (Cout, TN) -> out_ref (25*Cout, TN)."""
    f32 = jnp.float32
    relu = lambda v: jnp.maximum(v, 0.0)

    o_b1, o_c2, o_b3, o_s0, o_s1 = offs
    b1 = bias_ref[o_b1:o_b1 + Cmid, :]           # (Cmid, 1)  conv1+bn1 bias
    c2 = bias_ref[o_c2:o_c2 + 9 * Cmid, :]       # (9*Cmid,1) conv2 const map (+bn2)
    b3 = bias_ref[o_b3:o_b3 + Cout, :]           # (Cout, 1)  conv3+bn3 bias
    s0b = bias_ref[o_s0:o_s0 + Cr, :]            # (Cr, 1)    SE dense0 bias
    s1b = bias_ref[o_s1:o_s1 + Cout, :]          # (Cout, 1)  SE dense1 bias

    x = x_ref[...]                               # (Cout, TN); also the identity

    # conv1 (1x1, pad=1) + bn1 + relu: only the centre pixel depends on x.
    a1 = relu(jnp.dot(w1t_ref[...], x, preferred_element_type=f32) + b1)     # (Cmid, TN)

    # conv2 (3x3, pad=1) + bn2 + relu: x-dependent part is a single matmul
    # against the tap stack; the conv1 padding-ring part is the constant c2.
    a2 = relu(jnp.dot(w2s_ref[...], a1, preferred_element_type=f32) + c2)    # (9*Cmid, TN)

    # conv3 (1x1, pad=1) + bn3 (bias distributed later): block-diagonal weight
    # applies w3 to all 9 interior pixels in one MXU op.
    y3 = jnp.dot(w3bd_ref[...], a2, preferred_element_type=f32)              # (9*Cout, TN)

    # SE: mean over the full 5x5 bn3 map.  Every one of the 25 pixels carries
    # +b3 and the 16 border pixels carry nothing else, so mean = sum/25 + b3.
    pooled = y3[0:Cout, :]
    for p in range(1, 9):
        pooled = pooled + y3[p * Cout:(p + 1) * Cout, :]
    pooled = pooled * inv_area + b3                                          # (Cout, TN)

    h = relu(jnp.dot(se0t_ref[...], pooled, preferred_element_type=f32) + s0b)  # (Cr, TN)
    logits = jnp.dot(se1t_ref[...], h, preferred_element_type=f32) + s1b        # (Cout, TN)
    gate = 1.0 / (1.0 + jnp.exp(-logits))                                        # (Cout, TN)

    # out = relu(gate * bn3_out + identity);  identity = x (Cin == Cout, 1x1).
    bp = gate * b3 + x                           # gate*border + identity (reused 25x)
    border = relu(bp).astype(out_ref.dtype)      # value of the 16 border pixels

    row = 0
    for h3 in range(5):
        for w3 in range(5):
            if 1 <= h3 <= 3 and 1 <= w3 <= 3:
                p = (h3 - 1) * 3 + (w3 - 1)
                seg = y3[p * Cout:(p + 1) * Cout, :]
                out_ref[row:row + Cout, :] = relu(
                    gate * seg + bp).astype(out_ref.dtype)
            else:
                out_ref[row:row + Cout, :] = border
            row += Cout


def se_residual_block(x_nchw, params, *, in_channel, out_channel, stride=1,
                      batch_tile=256):
    """Forward pass of Se_ResidualBlock.  x_nchw: (N, Cin, H, W) float32."""
    N, C, H, W = x_nchw.shape
    assert C == in_channel
    assert out_channel % 4 == 0
    Cmid = out_channel // 4
    Cr = out_channel // 4            # SELayer dense sizes use out_channel / 4
    Cout = out_channel
    down_sample = (stride != 1) or (in_channel != out_channel)
    if down_sample:
        # TODO(synk): the down_sample branch always crashes in the reference
        # module (torch.add gets incompatible spatial sizes that can never
        # broadcast), so it is not implemented here.
        raise NotImplementedError(
            "down_sample configurations cannot run in the reference module")
    if H != 1 or W != 1:
        raise ValueError(
            "torch.add in the reference module only broadcasts when the "
            "identity spatial size is 1 (H == W == 1)")

    f32 = jnp.float32
    hi = jax.lax.Precision.HIGHEST
    H3, W3 = H + 4, W + 4            # 5 x 5 output map

    # ---- fold BatchNorm (inference) + conv bias into the conv weights:
    #      relu((x@w + b)*s + t) == relu(x@(w*s) + (b*s + t))
    def fold(w, b, s, t):
        return (w * s).astype(f32), (b * s + t).astype(f32)

    w1f, B1 = fold(params['w1'], params['b1'], params['s1'], params['t1'])
    w2f, B2 = fold(params['w2'], params['b2'], params['s2'], params['t2'])
    w3f, B3 = fold(params['w3'], params['b3'], params['s3'], params['t3'])

    # ---- batch-invariant constants, hoisted out of the kernel --------------
    ring = jnp.maximum(B1.reshape(Cmid), 0.0)        # conv1 padding ring after relu

    W1t = jnp.transpose(w1f)                         # (Cmid, Cin)

    # conv2 x-dependent tap stack: output pixel (y, x) sees the centre of the
    # conv1 output through tap (2-y, 2-x).
    W2stack = jnp.concatenate(
        [jnp.transpose(w2f[2 - y, 2 - x]) for y in range(3) for x in range(3)],
        axis=0)                                      # (9*Cmid, Cmid)

    # conv2 constant map: contribution of the constant conv1 ring + bn2 bias.
    a1_const = jnp.tile(ring[None, None, :], (3, 3, 1)).at[1, 1, :].set(0.0)
    pad_const = jnp.pad(a1_const, ((1, 1), (1, 1), (0, 0)))
    c2map = jnp.zeros((3, 3, Cmid), f32)
    for dy in range(3):
        for dx in range(3):
            c2map = c2map + jnp.einsum('yxc,cd->yxd',
                                       pad_const[dy:dy + 3, dx:dx + 3, :],
                                       w2f[dy, dx], precision=hi)
    c2col = (c2map + B2.reshape(1, 1, Cmid)).reshape(9 * Cmid)

    # conv3: same w3 for each of the 9 interior pixels -> block-diagonal weight.
    W3bd = jnp.kron(jnp.eye(9, dtype=f32), jnp.transpose(w3f))   # (9*Cout, 9*Cmid)

    SE0t = jnp.transpose(params['se0w'].astype(f32))             # (Cr, Cout)
    SE1t = jnp.transpose(params['se1w'].astype(f32))             # (Cout, Cr)

    # pack the small per-channel vectors into a single column array (one DMA).
    def pack_columns(vectors):
        offs, cols, off = [], [], 0
        for v in vectors:
            n = int(v.shape[0])
            k = ((n + 7) // 8) * 8               # keep slice starts sublane-aligned
            offs.append(off)
            cols.append(jnp.pad(v.astype(f32), (0, k - n)))
            off += k
        return jnp.concatenate(cols).reshape(off, 1), tuple(offs)

    bias_pack, offs = pack_columns([
        B1.reshape(Cmid), c2col, B3.reshape(Cout),
        params['se0b'].reshape(Cr).astype(f32),
        params['se1b'].reshape(Cout).astype(f32)])

    # ---- batch tiling: batch on the lane axis, TN a multiple of 128 ---------
    # Double-buffered x + out at f32 is ~3.3 KB/sample, so TN=256 stays far
    # below even v7x's 32 MiB scoped-VMEM default (no vmem_limit override).
    TN = batch_tile if N >= batch_tile else 128
    N_pad = ((N + TN - 1) // TN) * TN
    xT = jnp.transpose(x_nchw.reshape(N, C)).astype(f32)          # (Cin, N)
    if N_pad != N:
        xT = jnp.pad(xT, ((0, 0), (0, N_pad - N)))

    rows = H3 * W3 * Cout

    def _resident(a):                    # whole array, fetched once (index 0,0)
        nd = a.ndim
        return pl.BlockSpec(a.shape, lambda i, _nd=nd: (0,) * _nd)

    weights = [W1t, W2stack, W3bd, SE0t, SE1t, bias_pack]
    in_specs = ([pl.BlockSpec((C, TN), lambda i: (0, i))]
                + [_resident(a) for a in weights])
    out_specs = pl.BlockSpec((rows, TN), lambda i: (0, i))

    kernel = functools.partial(_se_resblock_kernel, Cmid=Cmid, Cout=Cout,
                               Cr=Cr, offs=offs,
                               inv_area=1.0 / float(H3 * W3))

    out_flat = pl.pallas_call(
        kernel,
        out_shape=jax.ShapeDtypeStruct((rows, N_pad), f32),
        grid=(N_pad // TN,),
        in_specs=in_specs,
        out_specs=out_specs,
        compiler_params=pltpu.CompilerParams(
            dimension_semantics=("parallel",)),
    )(xT, *weights)

    out = out_flat[:, :N].reshape(H3, W3, Cout, N)    # rows ordered (h3, w3, c)
    return jnp.transpose(out, (3, 2, 0, 1))           # (N, Cout, H3, W3)


def make_params(key, in_channel, out_channel):
    """Deterministic synthetic parameters matching the module's __init__ shapes."""
    Cmid = out_channel // 4
    Cr = out_channel // 4          # SELayer dense sizes use out_channel / 4
    f = 0.01
    ks = jax.random.split(key, 13)

    def bn_fold(k, c, eps=1e-4):
        k1, k2, k3, k4 = jax.random.split(k, 4)
        gamma = jax.random.uniform(k1, (c,), jnp.float32, 0.5, 1.5)
        beta = 0.1 * jax.random.normal(k2, (c,), jnp.float32)
        mean = 0.1 * jax.random.normal(k3, (c,), jnp.float32)
        var = jax.random.uniform(k4, (c,), jnp.float32, 0.5, 1.5)
        scale = gamma / jnp.sqrt(var + eps)
        shift = beta - mean * scale
        return scale.reshape(1, c), shift.reshape(1, c)

    p = {}
    p['w1'] = f * jax.random.normal(ks[0], (in_channel, Cmid), jnp.float32)
    p['b1'] = f * jax.random.normal(ks[1], (1, Cmid), jnp.float32)
    p['s1'], p['t1'] = bn_fold(ks[2], Cmid)
    p['w2'] = f * jax.random.normal(ks[3], (3, 3, Cmid, Cmid), jnp.float32)
    p['b2'] = f * jax.random.normal(ks[4], (1, Cmid), jnp.float32)
    p['s2'], p['t2'] = bn_fold(ks[5], Cmid)
    p['w3'] = f * jax.random.normal(ks[6], (Cmid, out_channel), jnp.float32)
    p['b3'] = f * jax.random.normal(ks[7], (1, out_channel), jnp.float32)
    p['s3'], p['t3'] = bn_fold(ks[8], out_channel)
    p['se0w'] = f * jax.random.normal(ks[9], (out_channel, Cr), jnp.float32)
    p['se0b'] = f * jax.random.normal(ks[10], (1, Cr), jnp.float32)
    p['se1w'] = f * jax.random.normal(ks[11], (Cr, out_channel), jnp.float32)
    p['se1b'] = f * jax.random.normal(ks[12], (1, out_channel), jnp.float32)
    return p


def _reference_forward(x_nchw, params):
    """Pure-JAX (XLA) replica of the PyTorch forward for the runnable config."""
    f32 = jnp.float32
    hi = jax.lax.Precision.HIGHEST
    p = params
    x = jnp.transpose(x_nchw, (0, 2, 3, 1)).astype(f32)          # NHWC
    dn = ('NHWC', 'HWIO', 'NHWC')

    def conv_bn(v, w, b, s, t):
        o = jax.lax.conv_general_dilated(v, w, (1, 1), [(1, 1), (1, 1)],
                                         dimension_numbers=dn, precision=hi)
        return ((o + b.reshape(1, 1, 1, -1)) * s.reshape(1, 1, 1, -1)
                + t.reshape(1, 1, 1, -1))

    a1 = jax.nn.relu(conv_bn(x, p['w1'][None, None], p['b1'], p['s1'], p['t1']))
    a2 = jax.nn.relu(conv_bn(a1, p['w2'], p['b2'], p['s2'], p['t2']))
    y3 = conv_bn(a2, p['w3'][None, None], p['b3'], p['s3'], p['t3'])
    pooled = jnp.mean(y3, axis=(1, 2))                           # (N, Cout)
    h = jax.nn.relu(jnp.dot(pooled, p['se0w'], precision=hi) + p['se0b'])
    gate = 1.0 / (1.0 + jnp.exp(-(jnp.dot(h, p['se1w'], precision=hi)
                                  + p['se1b'])))
    out = jax.nn.relu(gate[:, None, None, :] * y3 + x)           # torch.add broadcast
    return jnp.transpose(out, (0, 3, 1, 2))


if __name__ == "__main__":
    # Because the module's 1x1 convs use padding=1, the main path grows to
    # (H+4, W+4) while the identity keeps (H, W); the reference PyTorch
    # forward therefore only runs when H == W == 1 (torch.add broadcasts the
    # (N, C, 1, 1) identity over the (N, C, 5, 5) main path).
    # N=500 with TN=256 -> padded to 512, 2 grid steps (both v7x TCs busy) and
    # exercises the batch-padding / slicing path.
    N, in_channel, out_channel, H, W = 500, 32, 32, 1, 1
    key = jax.random.PRNGKey(0)
    kx, kp = jax.random.split(key)
    x = jax.random.normal(kx, (N, in_channel, H, W), jnp.float32)
    params = make_params(kp, in_channel, out_channel)

    out = se_residual_block(x, params, in_channel=in_channel,
                            out_channel=out_channel, stride=1, batch_tile=256)
    out = jax.block_until_ready(out)
    assert out.shape == (N, out_channel, H + 4, W + 4)

    ref = _reference_forward(x, params)
    max_err = float(jnp.max(jnp.abs(out - ref)))
    assert max_err < 1e-4, f"kernel/reference mismatch: {max_err}"
    print("KERNEL_OK")
</pallas_src>

<mosaic_0001>
module attributes {stable_mosaic.version = 11 : i64} {
  func.func @_se_resblock_kernel(%arg0: i32, %arg1: memref<32x256xf32, #tpu.memory_space<vmem>>, %arg2: memref<8x32xf32, #tpu.memory_space<vmem>>, %arg3: memref<72x8xf32, #tpu.memory_space<vmem>>, %arg4: memref<288x72xf32, #tpu.memory_space<vmem>>, %arg5: memref<8x32xf32, #tpu.memory_space<vmem>>, %arg6: memref<32x8xf32, #tpu.memory_space<vmem>>, %arg7: memref<152x1xf32, #tpu.memory_space<vmem>>, %arg8: memref<800x256xf32, #tpu.memory_space<vmem>>) attributes {dimension_semantics = [#tpu.dimension_semantics<parallel>], iteration_bounds = array<i64: 2>, scalar_prefetch = 0 : i64, scratch_operands = 0 : i64, tpu.core_type = #tpu.core_type<tc>, window_params = [{transform_indices = @transform_0, window_bounds = array<i64: 32, 256>}, {pipeline_mode = #tpu.pipeline_mode<synchronous>, transform_indices = @transform_1, window_bounds = array<i64: 8, 32>}, {pipeline_mode = #tpu.pipeline_mode<synchronous>, transform_indices = @transform_2, window_bounds = array<i64: 72, 8>}, {pipeline_mode = #tpu.pipeline_mode<synchronous>, transform_indices = @transform_3, window_bounds = array<i64: 288, 72>}, {pipeline_mode = #tpu.pipeline_mode<synchronous>, transform_indices = @transform_4, window_bounds = array<i64: 8, 32>}, {pipeline_mode = #tpu.pipeline_mode<synchronous>, transform_indices = @transform_5, window_bounds = array<i64: 32, 8>}, {pipeline_mode = #tpu.pipeline_mode<synchronous>, transform_indices = @transform_6, window_bounds = array<i64: 152, 1>}, {transform_indices = @transform_7, window_bounds = array<i64: 800, 256>}]} {
    %c0 = arith.constant 0 : index
    %c0_0 = arith.constant 0 : index
    %0 = vector.load %arg7[%c0, %c0_0] : memref<152x1xf32, #tpu.memory_space<vmem>>, vector<8x1xf32>
    %c8 = arith.constant 8 : index
    %c0_1 = arith.constant 0 : index
    %1 = vector.load %arg7[%c8, %c0_1] : memref<152x1xf32, #tpu.memory_space<vmem>>, vector<72x1xf32>
    %c80 = arith.constant 80 : index
    %c0_2 = arith.constant 0 : index
    %2 = vector.load %arg7[%c80, %c0_2] : memref<152x1xf32, #tpu.memory_space<vmem>>, vector<32x1xf32>
    %c112 = arith.constant 112 : index
    %c0_3 = arith.constant 0 : index
    %3 = vector.load %arg7[%c112, %c0_3] : memref<152x1xf32, #tpu.memory_space<vmem>>, vector<8x1xf32>
    %c120 = arith.constant 120 : index
    %c0_4 = arith.constant 0 : index
    %4 = vector.load %arg7[%c120, %c0_4] : memref<152x1xf32, #tpu.memory_space<vmem>>, vector<32x1xf32>
    %c0_5 = arith.constant 0 : index
    %c0_6 = arith.constant 0 : index
    %5 = vector.load %arg1[%c0_5, %c0_6] : memref<32x256xf32, #tpu.memory_space<vmem>>, vector<32x256xf32>
    %c0_7 = arith.constant 0 : index
    %c0_8 = arith.constant 0 : index
    %6 = vector.load %arg2[%c0_7, %c0_8] : memref<8x32xf32, #tpu.memory_space<vmem>>, vector<8x32xf32>
    %cst = arith.constant dense<0.000000e+00> : vector<8x256xf32>
    %7 = tpu.matmul %6, %5, %cst {dimension_numbers = #tpu.dot_dimension_numbers<[1], [0], [0], [1], [0, 0, 1, 1], [], []>} : vector<8x32xf32>, vector<32x256xf32>, vector<8x256xf32> -> vector<8x256xf32>
    %8 = vector.broadcast %0 : vector<8x1xf32> to vector<8x256xf32>
    %9 = arith.addf %7, %8 : vector<8x256xf32>
    %cst_9 = arith.constant 0.000000e+00 : f32
    %10 = vector.broadcast %cst_9 : f32 to vector<8x256xf32>
    %11 = arith.maximumf %9, %10 : vector<8x256xf32>
    %c0_10 = arith.constant 0 : index
    %c0_11 = arith.constant 0 : index
    %12 = vector.load %arg3[%c0_10, %c0_11] : memref<72x8xf32, #tpu.memory_space<vmem>>, vector<72x8xf32>
    %cst_12 = arith.constant dense<0.000000e+00> : vector<72x256xf32>
    %13 = tpu.matmul %12, %11, %cst_12 {dimension_numbers = #tpu.dot_dimension_numbers<[1], [0], [0], [1], [0, 0, 1, 1], [], []>} : vector<72x8xf32>, vector<8x256xf32>, vector<72x256xf32> -> vector<72x256xf32>
    %14 = vector.broadcast %1 : vector<72x1xf32> to vector<72x256xf32>
    %15 = arith.addf %13, %14 : vector<72x256xf32>
    %cst_13 = arith.constant 0.000000e+00 : f32
    %16 = vector.broadcast %cst_13 : f32 to vector<72x256xf32>
    %17 = arith.maximumf %15, %16 : vector<72x256xf32>
    %c0_14 = arith.constant 0 : index
    %c0_15 = arith.constant 0 : index
    %18 = vector.load %arg4[%c0_14, %c0_15] : memref<288x72xf32, #tpu.memory_space<vmem>>, vector<288x72xf32>
    %cst_16 = arith.constant dense<0.000000e+00> : vector<288x256xf32>
    %19 = tpu.matmul %18, %17, %cst_16 {dimension_numbers = #tpu.dot_dimension_numbers<[1], [0], [0], [1], [0, 0, 1, 1], [], []>} : vector<288x72xf32>, vector<72x256xf32>, vector<288x256xf32> -> vector<288x256xf32>
    %20 = vector.extract_strided_slice %19 {offsets = [0, 0], sizes = [32, 256], strides = [1, 1]} : vector<288x256xf32> to vector<32x256xf32>
    %21 = vector.extract_strided_slice %19 {offsets = [32, 0], sizes = [32, 256], strides = [1, 1]} : vector<288x256xf32> to vector<32x256xf32>
    %22 = arith.addf %20, %21 : vector<32x256xf32>
    %23 = vector.extract_strided_slice %19 {offsets = [64, 0], sizes = [32, 256], strides = [1, 1]} : vector<288x256xf32> to vector<32x256xf32>
    %24 = arith.addf %22, %23 : vector<32x256xf32>
    %25 = vector.extract_strided_slice %19 {offsets = [96, 0], sizes = [32, 256], strides = [1, 1]} : vector<288x256xf32> to vector<32x256xf32>
    %26 = arith.addf %24, %25 : vector<32x256xf32>
    %27 = vector.extract_strided_slice %19 {offsets = [128, 0], sizes = [32, 256], strides = [1, 1]} : vector<288x256xf32> to vector<32x256xf32>
    %28 = arith.addf %26, %27 : vector<32x256xf32>
    %29 = vector.extract_strided_slice %19 {offsets = [160, 0], sizes = [32, 256], strides = [1, 1]} : vector<288x256xf32> to vector<32x256xf32>
    %30 = arith.addf %28, %29 : vector<32x256xf32>
    %31 = vector.extract_strided_slice %19 {offsets = [192, 0], sizes = [32, 256], strides = [1, 1]} : vector<288x256xf32> to vector<32x256xf32>
    %32 = arith.addf %30, %31 : vector<32x256xf32>
    %33 = vector.extract_strided_slice %19 {offsets = [224, 0], sizes = [32, 256], strides = [1, 1]} : vector<288x256xf32> to vector<32x256xf32>
    %34 = arith.addf %32, %33 : vector<32x256xf32>
    %35 = vector.extract_strided_slice %19 {offsets = [256, 0], sizes = [32, 256], strides = [1, 1]} : vector<288x256xf32> to vector<32x256xf32>
    %36 = arith.addf %34, %35 : vector<32x256xf32>
    %cst_17 = arith.constant 4.000000e-02 : f32
    %37 = vector.broadcast %cst_17 : f32 to vector<32x256xf32>
    %38 = arith.mulf %36, %37 : vector<32x256xf32>
    %39 = vector.broadcast %2 : vector<32x1xf32> to vector<32x256xf32>
    %40 = arith.addf %38, %39 : vector<32x256xf32>
    %c0_18 = arith.constant 0 : index
    %c0_19 = arith.constant 0 : index
    %41 = vector.load %arg5[%c0_18, %c0_19] : memref<8x32xf32, #tpu.memory_space<vmem>>, vector<8x32xf32>
    %cst_20 = arith.constant dense<0.000000e+00> : vector<8x256xf32>
    %42 = tpu.matmul %41, %40, %cst_20 {dimension_numbers = #tpu.dot_dimension_numbers<[1], [0], [0], [1], [0, 0, 1, 1], [], []>} : vector<8x32xf32>, vector<32x256xf32>, vector<8x256xf32> -> vector<8x256xf32>
    %43 = vector.broadcast %3 : vector<8x1xf32> to vector<8x256xf32>
    %44 = arith.addf %42, %43 : vector<8x256xf32>
    %cst_21 = arith.constant 0.000000e+00 : f32
    %45 = vector.broadcast %cst_21 : f32 to vector<8x256xf32>
    %46 = arith.maximumf %44, %45 : vector<8x256xf32>
    %c0_22 = arith.constant 0 : index
    %c0_23 = arith.constant 0 : index
    %47 = vector.load %arg6[%c0_22, %c0_23] : memref<32x8xf32, #tpu.memory_space<vmem>>, vector<32x8xf32>
    %cst_24 = arith.constant dense<0.000000e+00> : vector<32x256xf32>
    %48 = tpu.matmul %47, %46, %cst_24 {dimension_numbers = #tpu.dot_dimension_numbers<[1], [0], [0], [1], [0, 0, 1, 1], [], []>} : vector<32x8xf32>, vector<8x256xf32>, vector<32x256xf32> -> vector<32x256xf32>
    %49 = vector.broadcast %4 : vector<32x1xf32> to vector<32x256xf32>
    %50 = arith.addf %48, %49 : vector<32x256xf32>
    %cst_25 = arith.constant 0.000000e+00 : f32
    %51 = vector.broadcast %cst_25 : f32 to vector<32x256xf32>
    %52 = arith.subf %51, %50 : vector<32x256xf32>
    %53 = math.exp %52 : vector<32x256xf32>
    %cst_26 = arith.constant 1.000000e+00 : f32
    %54 = vector.broadcast %cst_26 : f32 to vector<32x256xf32>
    %55 = arith.addf %54, %53 : vector<32x256xf32>
    %cst_27 = arith.constant 1.000000e+00 : f32
    %56 = vector.broadcast %cst_27 : f32 to vector<32x256xf32>
    %57 = arith.divf %56, %55 : vector<32x256xf32>
    %58 = vector.broadcast %2 : vector<32x1xf32> to vector<32x256xf32>
    %59 = arith.mulf %57, %58 : vector<32x256xf32>
    %60 = arith.addf %59, %5 : vector<32x256xf32>
    %cst_28 = arith.constant 0.000000e+00 : f32
    %61 = vector.broadcast %cst_28 : f32 to vector<32x256xf32>
    %62 = arith.maximumf %60, %61 : vector<32x256xf32>
    %c0_29 = arith.constant 0 : index
    %c0_30 = arith.constant 0 : index
    %63 = vector.load %arg8[%c0_29, %c0_30] : memref<800x256xf32, #tpu.memory_space<vmem>>, vector<32x256xf32>
    tpu.vector_store %arg8[%c0_29, %c0_30], %62 {strides = array<i32>} : memref<800x256xf32, #tpu.memory_space<vmem>>, vector<32x256xf32>,
    %c32 = arith.constant 32 : index
    %c0_31 = arith.constant 0 : index
    %64 = vector.load %arg8[%c32, %c0_31] : memref<800x256xf32, #tpu.memory_space<vmem>>, vector<32x256xf32>
    tpu.vector_store %arg8[%c32, %c0_31], %62 {strides = array<i32>} : memref<800x256xf32, #tpu.memory_space<vmem>>, vector<32x256xf32>,
    %c64 = arith.constant 64 : index
    %c0_32 = arith.constant 0 : index
    %65 = vector.load %arg8[%c64, %c0_32] : memref<800x256xf32, #tpu.memory_space<vmem>>, vector<32x256xf32>
    tpu.vector_store %arg8[%c64, %c0_32], %62 {strides = array<i32>} : memref<800x256xf32, #tpu.memory_space<vmem>>, vector<32x256xf32>,
    %c96 = arith.constant 96 : index
    %c0_33 = arith.constant 0 : index
    %66 = vector.load %arg8[%c96, %c0_33] : memref<800x256xf32, #tpu.memory_space<vmem>>, vector<32x256xf32>
    tpu.vector_store %arg8[%c96, %c0_33], %62 {strides = array<i32>} : memref<800x256xf32, #tpu.memory_space<vmem>>, vector<32x256xf32>,
    %c128 = arith.constant 128 : index
    %c0_34 = arith.constant 0 : index
    %67 = vector.load %arg8[%c128, %c0_34] : memref<800x256xf32, #tpu.memory_space<vmem>>, vector<32x256xf32>
    tpu.vector_store %arg8[%c128, %c0_34], %62 {strides = array<i32>} : memref<800x256xf32, #tpu.memory_space<vmem>>, vector<32x256xf32>,
    %c160 = arith.constant 160 : index
    %c0_35 = arith.constant 0 : index
    %68 = vector.load %arg8[%c160, %c0_35] : memref<800x256xf32, #tpu.memory_space<vmem>>, vector<32x256xf32>
    tpu.vector_store %arg8[%c160, %c0_35], %62 {strides = array<i32>} : memref<800x256xf32, #tpu.memory_space<vmem>>, vector<32x256xf32>,
    %69 = vector.extract_strided_slice %19 {offsets = [0, 0], sizes = [32, 256], strides = [1, 1]} : vector<288x256xf32> to vector<32x256xf32>
    %70 = arith.mulf %57, %69 : vector<32x256xf32>
    %71 = arith.addf %70, %60 : vector<32x256xf32>
    %cst_36 = arith.constant 0.000000e+00 : f32
    %72 = vector.broadcast %cst_36 : f32 to vector<32x256xf32>
    %73 = arith.maximumf %71, %72 : vector<32x256xf32>
    %c192 = arith.constant 192 : index
    %c0_37 = arith.constant 0 : index
    %74 = vector.load %arg8[%c192, %c0_37] : memref<800x256xf32, #tpu.memory_space<vmem>>, vector<32x256xf32>
    tpu.vector_store %arg8[%c192, %c0_37], %73 {strides = array<i32>} : memref<800x256xf32, #tpu.memory_space<vmem>>, vector<32x256xf32>,
    %75 = vector.extract_strided_slice %19 {offsets = [32, 0], sizes = [32, 256], strides = [1, 1]} : vector<288x256xf32> to vector<32x256xf32>
    %76 = arith.mulf %57, %75 : vector<32x256xf32>
    %77 = arith.addf %76, %60 : vector<32x256xf32>
    %cst_38 = arith.constant 0.000000e+00 : f32
    %78 = vector.broadcast %cst_38 : f32 to vector<32x256xf32>
    %79 = arith.maximumf %77, %78 : vector<32x256xf32>
    %c224 = arith.constant 224 : index
    %c0_39 = arith.constant 0 : index
    %80 = vector.load %arg8[%c224, %c0_39] : memref<800x256xf32, #tpu.memory_space<vmem>>, vector<32x256xf32>
    tpu.vector_store %arg8[%c224, %c0_39], %79 {strides = array<i32>} : memref<800x256xf32, #tpu.memory_space<vmem>>, vector<32x256xf32>,
    %81 = vector.extract_strided_slice %19 {offsets = [64, 0], sizes = [32, 256], strides = [1, 1]} : vector<288x256xf32> to vector<32x256xf32>
    %82 = arith.mulf %57, %81 : vector<32x256xf32>
    %83 = arith.addf %82, %60 : vector<32x256xf32>
    %cst_40 = arith.constant 0.000000e+00 : f32
    %84 = vector.broadcast %cst_40 : f32 to vector<32x256xf32>
    %85 = arith.maximumf %83, %84 : vector<32x256xf32>
    %c256 = arith.constant 256 : index
    %c0_41 = arith.constant 0 : index
    %86 = vector.load %arg8[%c256, %c0_41] : memref<800x256xf32, #tpu.memory_space<vmem>>, vector<32x256xf32>
    tpu.vector_store %arg8[%c256, %c0_41], %85 {strides = array<i32>} : memref<800x256xf32, #tpu.memory_space<vmem>>, vector<32x256xf32>,
    %c288 = arith.constant 288 : index
    %c0_42 = arith.constant 0 : index
    %87 = vector.load %arg8[%c288, %c0_42] : memref<800x256xf32, #tpu.memory_space<vmem>>, vector<32x256xf32>
    tpu.vector_store %arg8[%c288, %c0_42], %62 {strides = array<i32>} : memref<800x256xf32, #tpu.memory_space<vmem>>, vector<32x256xf32>,
    %c320 = arith.constant 320 : index
    %c0_43 = arith.constant 0 : index
    %88 = vector.load %arg8[%c320, %c0_43] : memref<800x256xf32, #tpu.memory_space<vmem>>, vector<32x256xf32>
    tpu.vector_store %arg8[%c320, %c0_43], %62 {strides = array<i32>} : memref<800x256xf32, #tpu.memory_space<vmem>>, vector<32x256xf32>,
    %89 = vector.extract_strided_slice %19 {offsets = [96, 0], sizes = [32, 256], strides = [1, 1]} : vector<288x256xf32> to vector<32x256xf32>
    %90 = arith.mulf %57, %89 : vector<32x256xf32>
    %91 = arith.addf %90, %60 : vector<32x256xf32>
    %cst_44 = arith.constant 0.000000e+00 : f32
    %92 = vector.broadcast %cst_44 : f32 to vector<32x256xf32>
    %93 = arith.maximumf %91, %92 : vector<32x256xf32>
    %c352 = arith.constant 352 : index
    %c0_45 = arith.constant 0 : index
    %94 = vector.load %arg8[%c352, %c0_45] : memref<800x256xf32, #tpu.memory_space<vmem>>, vector<32x256xf32>
    tpu.vector_store %arg8[%c352, %c0_45], %93 {strides = array<i32>} : memref<800x256xf32, #tpu.memory_space<vmem>>, vector<32x256xf32>,
    %95 = vector.extract_strided_slice %19 {offsets = [128, 0], sizes = [32, 256], strides = [1, 1]} : vector<288x256xf32> to vector<32x256xf32>
    %96 = arith.mulf %57, %95 : vector<32x256xf32>
    %97 = arith.addf %96, %60 : vector<32x256xf32>
    %cst_46 = arith.constant 0.000000e+00 : f32
    %98 = vector.broadcast %cst_46 : f32 to vector<32x256xf32>
    %99 = arith.maximumf %97, %98 : vector<32x256xf32>
    %c384 = arith.constant 384 : index
    %c0_47 = arith.constant 0 : index
    %100 = vector.load %arg8[%c384, %c0_47] : memref<800x256xf32, #tpu.memory_space<vmem>>, vector<32x256xf32>
    tpu.vector_store %arg8[%c384, %c0_47], %99 {strides = array<i32>} : memref<800x256xf32, #tpu.memory_space<vmem>>, vector<32x256xf32>,
    %101 = vector.extract_strided_slice %19 {offsets = [160, 0], sizes = [32, 256], strides = [1, 1]} : vector<288x256xf32> to vector<32x256xf32>
    %102 = arith.mulf %57, %101 : vector<32x256xf32>
    %103 = arith.addf %102, %60 : vector<32x256xf32>
    %cst_48 = arith.constant 0.000000e+00 : f32
    %104 = vector.broadcast %cst_48 : f32 to vector<32x256xf32>
    %105 = arith.maximumf %103, %104 : vector<32x256xf32>
    %c416 = arith.constant 416 : index
    %c0_49 = arith.constant 0 : index
    %106 = vector.load %arg8[%c416, %c0_49] : memref<800x256xf32, #tpu.memory_space<vmem>>, vector<32x256xf32>
    tpu.vector_store %arg8[%c416, %c0_49], %105 {strides = array<i32>} : memref<800x256xf32, #tpu.memory_space<vmem>>, vector<32x256xf32>,
    %c448 = arith.constant 448 : index
    %c0_50 = arith.constant 0 : index
    %107 = vector.load %arg8[%c448, %c0_50] : memref<800x256xf32, #tpu.memory_space<vmem>>, vector<32x256xf32>
    tpu.vector_store %arg8[%c448, %c0_50], %62 {strides = array<i32>} : memref<800x256xf32, #tpu.memory_space<vmem>>, vector<32x256xf32>,
    %c480 = arith.constant 480 : index
    %c0_51 = arith.constant 0 : index
    %108 = vector.load %arg8[%c480, %c0_51] : memref<800x256xf32, #tpu.memory_space<vmem>>, vector<32x256xf32>
    tpu.vector_store %arg8[%c480, %c0_51], %62 {strides = array<i32>} : memref<800x256xf32, #tpu.memory_space<vmem>>, vector<32x256xf32>,
    %109 = vector.extract_strided_slice %19 {offsets = [192, 0], sizes = [32, 256], strides = [1, 1]} : vector<288x256xf32> to vector<32x256xf32>
    %110 = arith.mulf %57, %109 : vector<32x256xf32>
    %111 = arith.addf %110, %60 : vector<32x256xf32>
    %cst_52 = arith.constant 0.000000e+00 : f32
    %112 = vector.broadcast %cst_52 : f32 to vector<32x256xf32>
    %113 = arith.maximumf %111, %112 : vector<32x256xf32>
    %c512 = arith.constant 512 : index
    %c0_53 = arith.constant 0 : index
    %114 = vector.load %arg8[%c512, %c0_53] : memref<800x256xf32, #tpu.memory_space<vmem>>, vector<32x256xf32>
    tpu.vector_store %arg8[%c512, %c0_53], %113 {strides = array<i32>} : memref<800x256xf32, #tpu.memory_space<vmem>>, vector<32x256xf32>,
    %115 = vector.extract_strided_slice %19 {offsets = [224, 0], sizes = [32, 256], strides = [1, 1]} : vector<288x256xf32> to vector<32x256xf32>
    %116 = arith.mulf %57, %115 : vector<32x256xf32>
    %117 = arith.addf %116, %60 : vector<32x256xf32>
    %cst_54 = arith.constant 0.000000e+00 : f32
    %118 = vector.broadcast %cst_54 : f32 to vector<32x256xf32>
    %119 = arith.maximumf %117, %118 : vector<32x256xf32>
    %c544 = arith.constant 544 : index
    %c0_55 = arith.constant 0 : index
    %120 = vector.load %arg8[%c544, %c0_55] : memref<800x256xf32, #tpu.memory_space<vmem>>, vector<32x256xf32>
    tpu.vector_store %arg8[%c544, %c0_55], %119 {strides = array<i32>} : memref<800x256xf32, #tpu.memory_space<vmem>>, vector<32x256xf32>,
    %121 = vector.extract_strided_slice %19 {offsets = [256, 0], sizes = [32, 256], strides = [1, 1]} : vector<288x256xf32> to vector<32x256xf32>
    %122 = arith.mulf %57, %121 : vector<32x256xf32>
    %123 = arith.addf %122, %60 : vector<32x256xf32>
    %cst_56 = arith.constant 0.000000e+00 : f32
    %124 = vector.broadcast %cst_56 : f32 to vector<32x256xf32>
    %125 = arith.maximumf %123, %124 : vector<32x256xf32>
    %c576 = arith.constant 576 : index
    %c0_57 = arith.constant 0 : index
    %126 = vector.load %arg8[%c576, %c0_57] : memref<800x256xf32, #tpu.memory_space<vmem>>, vector<32x256xf32>
    tpu.vector_store %arg8[%c576, %c0_57], %125 {strides = array<i32>} : memref<800x256xf32, #tpu.memory_space<vmem>>, vector<32x256xf32>,
    %c608 = arith.constant 608 : index
    %c0_58 = arith.constant 0 : index
    %127 = vector.load %arg8[%c608, %c0_58] : memref<800x256xf32, #tpu.memory_space<vmem>>, vector<32x256xf32>
    tpu.vector_store %arg8[%c608, %c0_58], %62 {strides = array<i32>} : memref<800x256xf32, #tpu.memory_space<vmem>>, vector<32x256xf32>,
    %c640 = arith.constant 640 : index
    %c0_59 = arith.constant 0 : index
    %128 = vector.load %arg8[%c640, %c0_59] : memref<800x256xf32, #tpu.memory_space<vmem>>, vector<32x256xf32>
    tpu.vector_store %arg8[%c640, %c0_59], %62 {strides = array<i32>} : memref<800x256xf32, #tpu.memory_space<vmem>>, vector<32x256xf32>,
    %c672 = arith.constant 672 : index
    %c0_60 = arith.constant 0 : index
    %129 = vector.load %arg8[%c672, %c0_60] : memref<800x256xf32, #tpu.memory_space<vmem>>, vector<32x256xf32>
    tpu.vector_store %arg8[%c672, %c0_60], %62 {strides = array<i32>} : memref<800x256xf32, #tpu.memory_space<vmem>>, vector<32x256xf32>,
    %c704 = arith.constant 704 : index
    %c0_61 = arith.constant 0 : index
    %130 = vector.load %arg8[%c704, %c0_61] : memref<800x256xf32, #tpu.memory_space<vmem>>, vector<32x256xf32>
    tpu.vector_store %arg8[%c704, %c0_61], %62 {strides = array<i32>} : memref<800x256xf32, #tpu.memory_space<vmem>>, vector<32x256xf32>,
    %c736 = arith.constant 736 : index
    %c0_62 = arith.constant 0 : index
    %131 = vector.load %arg8[%c736, %c0_62] : memref<800x256xf32, #tpu.memory_space<vmem>>, vector<32x256xf32>
    tpu.vector_store %arg8[%c736, %c0_62], %62 {strides = array<i32>} : memref<800x256xf32, #tpu.memory_space<vmem>>, vector<32x256xf32>,
    %c768 = arith.constant 768 : index
    %c0_63 = arith.constant 0 : index
    %132 = vector.load %arg8[%c768, %c0_63] : memref<800x256xf32, #tpu.memory_space<vmem>>, vector<32x256xf32>
    tpu.vector_store %arg8[%c768, %c0_63], %62 {strides = array<i32>} : memref<800x256xf32, #tpu.memory_space<vmem>>, vector<32x256xf32>,
    return
  }
  func.func @transform_0(%arg0: i32) -> (i32, i32) {
    %c0_i32 = arith.constant 0 : i32
    %c0_i32_0 = arith.constant 0 : i32
    return %c0_i32, %arg0 : i32, i32
  }
  func.func @transform_1(%arg0: i32) -> (i32, i32) {
    %c0_i32 = arith.constant 0 : i32
    %c0_i32_0 = arith.constant 0 : i32
    %c0_i32_1 = arith.constant 0 : i32
    return %c0_i32, %c0_i32_0 : i32, i32
  }
  func.func @transform_2(%arg0: i32) -> (i32, i32) {
    %c0_i32 = arith.constant 0 : i32
    %c0_i32_0 = arith.constant 0 : i32
    %c0_i32_1 = arith.constant 0 : i32
    return %c0_i32, %c0_i32_0 : i32, i32
  }
  func.func @transform_3(%arg0: i32) -> (i32, i32) {
    %c0_i32 = arith.constant 0 : i32
    %c0_i32_0 = arith.constant 0 : i32
    %c0_i32_1 = arith.constant 0 : i32
    return %c0_i32, %c0_i32_0 : i32, i32
  }
  func.func @transform_4(%arg0: i32) -> (i32, i32) {
    %c0_i32 = arith.constant 0 : i32
    %c0_i32_0 = arith.constant 0 : i32
    %c0_i32_1 = arith.constant 0 : i32
    return %c0_i32, %c0_i32_0 : i32, i32
  }
  func.func @transform_5(%arg0: i32) -> (i32, i32) {
    %c0_i32 = arith.constant 0 : i32
    %c0_i32_0 = arith.constant 0 : i32
    %c0_i32_1 = arith.constant 0 : i32
    return %c0_i32, %c0_i32_0 : i32, i32
  }
  func.func @transform_6(%arg0: i32) -> (i32, i32) {
    %c0_i32 = arith.constant 0 : i32
    %c0_i32_0 = arith.constant 0 : i32
    %c0_i32_1 = arith.constant 0 : i32
    return %c0_i32, %c0_i32_0 : i32, i32
  }
  func.func @transform_7(%arg0: i32) -> (i32, i32) {
    %c0_i32 = arith.constant 0 : i32
    %c0_i32_0 = arith.constant 0 : i32
    return %c0_i32, %arg0 : i32, i32
  }
}

</mosaic_0001>

<llo_original>
// kernel: tpu_custom_call.1
$region0: #{tpu_custom_call.1}
  #allocation0 [shape = 'u32[]', space=smem, size = 0x4, offset = 0x4, fixed_abs, tag = 'smem constant byte address 0x4 - core index']
  #allocation1 [shape = 'u32[72,128]{1,0:T(1,128)}', space=vmem, size = 0x9000, scoped, tag = 'internal scratch']
  %s0 = inlined_call_operand.hbm [shape: f32[32,512], index: 0, kind: input, shape index: {}]
  %s1 = inlined_call_operand.hbm [shape: f32[8,32], index: 1, kind: input, shape index: {}]
  %s2 = inlined_call_operand.vmem [shape: f32[72,8], index: 2, kind: input, shape index: {}]
  %s3 = inlined_call_operand.vmem [shape: f32[288,72], index: 3, kind: input, shape index: {}]
  %s4 = inlined_call_operand.hbm [shape: f32[8,32], index: 4, kind: input, shape index: {}]
  %s5 = inlined_call_operand.vmem [shape: f32[32,8], index: 5, kind: input, shape index: {}]
  %s6 = inlined_call_operand.vmem [shape: f32[152,1], index: 6, kind: input, shape index: {}]
  %s7 = inlined_call_operand.hbm [shape: f32[800,512], index: 7, kind: output, shape index: {}]
  %s8 = sld [smem:[#allocation0]]
  $region73: #{tpu_custom_call.1} parent=0
    _
  %s10 = ssub.s32 1, %s8
  %s11 = scalar_select 0, %s10, %s8
  $region1: #{tpu_custom_call.1} parent=0
    #allocation2 [shape = 'u8[65536]{0}', space=vmem, size = 0x10000, scoped, tag = 'input window, operand 0']
    #allocation3 [shape = 's32[2]{0}', space=sflag, size = 0x8, scoped, tag = 'scoped memory for tpu_custom_call.1']
    #allocation4 [shape = 's32[2]{0}', space=sflag, size = 0x8, scoped, tag = 'scoped memory for tpu_custom_call.1']
    #allocation5 [shape = 'u8[4096]{0}', space=vmem, size = 0x1000, scoped, tag = 'input window, operand 1, single buffered']
    #allocation6 [shape = 's32[1]{0}', space=sflag, size = 0x4, scoped, tag = 'scoped memory for tpu_custom_call.1']
    #allocation7 [shape = 'u8[4096]{0}', space=vmem, size = 0x1000, scoped, tag = 'input window, operand 4, single buffered']
    #allocation8 [shape = 'u8[1638400]{0}', space=vmem, size = 0x190000, scoped, tag = 'output window, operand 0']
    %12 = vsyncpa [#allocation3], 0
    %s13 = scalar_lea.sflag [#allocation3], 1
    %14 = vsyncpa %s13, 0
    %15 = vsyncpa [#allocation6], 0
    %16 = vsyncpa [#allocation4], 0
    %s17 = scalar_lea.sflag [#allocation4], 1
    %18 = vsyncpa %s17, 0
    loop: start=0, step=1, limit=4
    $region2: #{tpu_custom_call.1} parent=1 // loop_pre_header
      _
    $region3: #{tpu_custom_call.1} parent=1 // loop_header
      %s20 = sphi 0, %s24
      %p21 = scmp.ge.s32.totalorder %s20, 4
      %s30 = sphi 0, %s32
      %s33 = sphi 0, %s30
      %s34 = sphi 0, %s33
      %s50 = sphi 0, %s34
      %s54 = sphi 0, %s54
      %s56 = sphi 0, %s54
      %s57 = sphi 0, %s56
      %s71 = sphi 0, %s57
      %s75 = sphi 0, %s75
      %s77 = sphi 0, %s75
      %s78 = sphi 0, %s77
      %s92 = sphi 0, %s78
      %s96 = sphi 0, %s96
      %s98 = sphi 0, %s96
      %s99 = sphi 0, %s98
      %s113 = sphi 0, %s99
      %s117 = sphi 0, %s117
      %s119 = sphi 0, %s117
      %s120 = sphi 0, %s119
      %s134 = sphi 0, %s120
      %s138 = sphi 0, %s138
      %s140 = sphi 0, %s138
      %s141 = sphi 0, %s140
      %s155 = sphi 0, %s141
      %s159 = sphi 0, %s159
      %s161 = sphi 0, %s159
      %s162 = sphi 0, %s161
      %s176 = sphi 0, %s162
      %s182 = sphi 0, %s184
      %s185 = sphi 0, %s182
      %s186 = sphi 0, %s185
      %s202 = sphi 0, %s186
    $region4: #{tpu_custom_call.1} parent=1 // loop_header_branch
      %23 = sbr.rel (%p21) target = $region8
    $region5: #{tpu_custom_call.1} parent=1 // loop_body
      %s25 = ssub.s32 %s20, 1
      %s26 = ssub.s32 %s20, 2
      %s27 = sadd.s32 %s20, 1
      %s28 = ssub.s32 %s20, %s27
      %p29 = scmp.eq.s32.totalorder %s28, 0
      %s31 = sadd.s32 %s30, 1
      %s32 = scalar_select %p29, %s30, %s31
      %p35 = pneg %p29
      %p36 = scmp.eq.s32.totalorder %s20, 1
      %p37 = por %p35, %p36
      %p38 = scmp.ne.s32.totalorder %s30, %s33
      %p39 = scmp.eq.s32.totalorder %s20, 0
      %p40 = por %p38, %p39
      %p41 = scmp.ne.s32.totalorder %s30, %s33
      %p42 = scmp.eq.s32.totalorder %s25, 1
      %p43 = por %p41, %p42
      %p44 = scmp.ne.s32.totalorder %s33, %s34
      %p45 = scmp.eq.s32.totalorder %s25, 0
      %p46 = por %p44, %p45
      %p47 = scmp.ne.s32.totalorder %s33, %s34
      %p48 = scmp.eq.s32.totalorder %s26, 1
      %p49 = por %p47, %p48
      %p51 = scmp.ne.s32.totalorder %s34, %s50
      %p52 = scmp.eq.s32.totalorder %s26, 0
      %p53 = por %p51, %p52
      %s55 = sadd.s32 %s54, 1
      %p58 = scmp.eq.s32.totalorder %s20, 1
      %p59 = scmp.ne.s32.totalorder %s54, %s56
      %p60 = scmp.eq.s32.totalorder %s20, 0
      %p61 = por %p59, %p60
      %p62 = scmp.ne.s32.totalorder %s54, %s56
      %p63 = scmp.eq.s32.totalorder %s25, 1
      %p64 = por %p62, %p63
      %p65 = scmp.ne.s32.totalorder %s56, %s57
      %p66 = scmp.eq.s32.totalorder %s25, 0
      %p67 = por %p65, %p66
      %p68 = scmp.ne.s32.totalorder %s56, %s57
      %p69 = scmp.eq.s32.totalorder %s26, 1
      %p70 = por %p68, %p69
      %p72 = scmp.ne.s32.totalorder %s57, %s71
      %p73 = scmp.eq.s32.totalorder %s26, 0
      %p74 = por %p72, %p73
      %s76 = sadd.s32 %s75, 1
      %p79 = scmp.eq.s32.totalorder %s20, 1
      %p80 = scmp.ne.s32.totalorder %s75, %s77
      %p81 = scmp.eq.s32.totalorder %s20, 0
      %p82 = por %p80, %p81
      %p83 = scmp.ne.s32.totalorder %s75, %s77
      %p84 = scmp.eq.s32.totalorder %s25, 1
      %p85 = por %p83, %p84
      %p86 = scmp.ne.s32.totalorder %s77, %s78
      %p87 = scmp.eq.s32.totalorder %s25, 0
      %p88 = por %p86, %p87
      %p89 = scmp.ne.s32.totalorder %s77, %s78
      %p90 = scmp.eq.s32.totalorder %s26, 1
      %p91 = por %p89, %p90
      %p93 = scmp.ne.s32.totalorder %s78, %s92
      %p94 = scmp.eq.s32.totalorder %s26, 0
      %p95 = por %p93, %p94
      %s97 = sadd.s32 %s96, 1
      %p100 = scmp.eq.s32.totalorder %s20, 1
      %p101 = scmp.ne.s32.totalorder %s96, %s98
      %p102 = scmp.eq.s32.totalorder %s20, 0
      %p103 = por %p101, %p102
      %p104 = scmp.ne.s32.totalorder %s96, %s98
      %p105 = scmp.eq.s32.totalorder %s25, 1
      %p106 = por %p104, %p105
      %p107 = scmp.ne.s32.totalorder %s98, %s99
      %p108 = scmp.eq.s32.totalorder %s25, 0
      %p109 = por %p107, %p108
      %p110 = scmp.ne.s32.totalorder %s98, %s99
      %p111 = scmp.eq.s32.totalorder %s26, 1
      %p112 = por %p110, %p111
      %p114 = scmp.ne.s32.totalorder %s99, %s113
      %p115 = scmp.eq.s32.totalorder %s26, 0
      %p116 = por %p114, %p115
      %s118 = sadd.s32 %s117, 1
      %p121 = scmp.eq.s32.totalorder %s20, 1
      %p122 = scmp.ne.s32.totalorder %s117, %s119
      %p123 = scmp.eq.s32.totalorder %s20, 0
      %p124 = por %p122, %p123
      %p125 = scmp.ne.s32.totalorder %s117, %s119
      %p126 = scmp.eq.s32.totalorder %s25, 1
      %p127 = por %p125, %p126
      %p128 = scmp.ne.s32.totalorder %s119, %s120
      %p129 = scmp.eq.s32.totalorder %s25, 0
      %p130 = por %p128, %p129
      %p131 = scmp.ne.s32.totalorder %s119, %s120
      %p132 = scmp.eq.s32.totalorder %s26, 1
      %p133 = por %p131, %p132
      %p135 = scmp.ne.s32.totalorder %s120, %s134
      %p136 = scmp.eq.s32.totalorder %s26, 0
      %p137 = por %p135, %p136
      %s139 = sadd.s32 %s138, 1
      %p142 = scmp.eq.s32.totalorder %s20, 1
      %p143 = scmp.ne.s32.totalorder %s138, %s140
      %p144 = scmp.eq.s32.totalorder %s20, 0
      %p145 = por %p143, %p144
      %p146 = scmp.ne.s32.totalorder %s138, %s140
      %p147 = scmp.eq.s32.totalorder %s25, 1
      %p148 = por %p146, %p147
      %p149 = scmp.ne.s32.totalorder %s140, %s141
      %p150 = scmp.eq.s32.totalorder %s25, 0
      %p151 = por %p149, %p150
      %p152 = scmp.ne.s32.totalorder %s140, %s141
      %p153 = scmp.eq.s32.totalorder %s26, 1
      %p154 = por %p152, %p153
      %p156 = scmp.ne.s32.totalorder %s141, %s155
      %p157 = scmp.eq.s32.totalorder %s26, 0
      %p158 = por %p156, %p157
      %s160 = sadd.s32 %s159, 1
      %p163 = scmp.eq.s32.totalorder %s20, 1
      %p164 = scmp.ne.s32.totalorder %s159, %s161
      %p165 = scmp.eq.s32.totalorder %s20, 0
      %p166 = por %p164, %p165
      %p167 = scmp.ne.s32.totalorder %s159, %s161
      %p168 = scmp.eq.s32.totalorder %s25, 1
      %p169 = por %p167, %p168
      %p170 = scmp.ne.s32.totalorder %s161, %s162
      %p171 = scmp.eq.s32.totalorder %s25, 0
      %p172 = por %p170, %p171
      %p173 = scmp.ne.s32.totalorder %s161, %s162
      %p174 = scmp.eq.s32.totalorder %s26, 1
      %p175 = por %p173, %p174
      %p177 = scmp.ne.s32.totalorder %s162, %s176
      %p178 = scmp.eq.s32.totalorder %s26, 0
      %p179 = por %p177, %p178
      %s180 = ssub.s32 %s20, %s27
      %p181 = scmp.eq.s32.totalorder %s180, 0
      %s183 = sadd.s32 %s182, 1
      %s184 = scalar_select %p181, %s182, %s183
      %p187 = pneg %p181
      %p188 = scmp.eq.s32.totalorder %s20, 1
      %p189 = por %p187, %p188
      %p190 = scmp.ne.s32.totalorder %s182, %s185
      %p191 = scmp.eq.s32.totalorder %s20, 0
      %p192 = por %p190, %p191
      %p193 = scmp.ne.s32.totalorder %s182, %s185
      %p194 = scmp.eq.s32.totalorder %s25, 1
      %p195 = por %p193, %p194
      %p196 = scmp.ne.s32.totalorder %s185, %s186
      %p197 = scmp.eq.s32.totalorder %s25, 0
      %p198 = por %p196, %p197
      %p199 = scmp.ne.s32.totalorder %s185, %s186
      %p200 = scmp.eq.s32.totalorder %s26, 1
      %p201 = por %p199, %p200
      %p203 = scmp.ne.s32.totalorder %s186, %s202
      %p204 = scmp.eq.s32.totalorder %s26, 0
      %p205 = por %p203, %p204
      %p206 = scmp.le.s32.totalorder 1, %s20
      %p207 = scmp.lt.s32.totalorder %s20, 3
      %p208 = pnand %p206, %p207
      %p209 = pneg %p208
      // Predicated region
      $region9: #{tpu_custom_call.1} parent=5 // pred_check
        _
      $region10: #{tpu_custom_call.1} parent=5 // pred_check_branch
        %211 = sbr.rel (%p208) target = $region12
      $region11: #{tpu_custom_call.1} parent=5 // pred_region
        %s212 = ssub.s32 %s20, 1
        // Predicated region
        $region13: #{tpu_custom_call.1} parent=11 // pred_check
          %p213 = pneg %p67
        $region14: #{tpu_custom_call.1} parent=11 // pred_check_branch
          %215 = sbr.rel (%p213) target = $region16
        $region15: #{tpu_custom_call.1} parent=11 // pred_region
          %217 = vsyncadd [#allocation6], 0
          %s219 = sshll.u32 %s1, 4
          %s220 = int_to_ptr.hbm [resolvable:$true] %s219
          %s221 = sshll.u32 [#allocation5], 4
          %s222 = int_to_ptr.vmem [resolvable:$true] %s221
          %224 = dma.hbm_to_vmem [thread:$0]  %s220, 128, %s222, [#allocation6]
        $region16: #{tpu_custom_call.1} parent=11 // pred_fallthru
          _
        // Predicated region
        $region17: #{tpu_custom_call.1} parent=11 // pred_check
          %p225 = pneg %p88
        $region18: #{tpu_custom_call.1} parent=11 // pred_check_branch
          %227 = sbr.rel (%p225) target = $region20
        $region19: #{tpu_custom_call.1} parent=11 // pred_region
          _
        $region20: #{tpu_custom_call.1} parent=11 // pred_fallthru
          _
        // Predicated region
        $region21: #{tpu_custom_call.1} parent=11 // pred_check
          %p228 = pneg %p109
        $region22: #{tpu_custom_call.1} parent=11 // pred_check_branch
          %230 = sbr.rel (%p228) target = $region24
        $region23: #{tpu_custom_call.1} parent=11 // pred_region
          _
        $region24: #{tpu_custom_call.1} parent=11 // pred_fallthru
          _
        // Predicated region
        $region25: #{tpu_custom_call.1} parent=11 // pred_check
          %p231 = pneg %p130
        $region26: #{tpu_custom_call.1} parent=11 // pred_check_branch
          %233 = sbr.rel (%p231) target = $region28
        $region27: #{tpu_custom_call.1} parent=11 // pred_region
          %235 = vsyncadd [#allocation6], 0
          %s237 = sshll.u32 %s4, 4
          %s238 = int_to_ptr.hbm [resolvable:$true] %s237
          %s239 = sshll.u32 [#allocation7], 4
          %s240 = int_to_ptr.vmem [resolvable:$true] %s239
          %242 = dma.hbm_to_vmem [thread:$0]  %s238, 128, %s240, [#allocation6]
        $region28: #{tpu_custom_call.1} parent=11 // pred_fallthru
          _
        // Predicated region
        $region29: #{tpu_custom_call.1} parent=11 // pred_check
          %p243 = pneg %p151
        $region30: #{tpu_custom_call.1} parent=11 // pred_check_branch
          %245 = sbr.rel (%p243) target = $region32
        $region31: #{tpu_custom_call.1} parent=11 // pred_region
          _
        $region32: #{tpu_custom_call.1} parent=11 // pred_fallthru
          _
        // Predicated region
        $region33: #{tpu_custom_call.1} parent=11 // pred_check
          %p246 = pneg %p172
        $region34: #{tpu_custom_call.1} parent=11 // pred_check_branch
          %248 = sbr.rel (%p246) target = $region36
        $region35: #{tpu_custom_call.1} parent=11 // pred_region
          _
        $region36: #{tpu_custom_call.1} parent=11 // pred_fallthru
          _
      $region12: #{tpu_custom_call.1} parent=5 // pred_fallthru
        _
      %p249 = scmp.lt.s32.totalorder %s20, 2
      // Predicated region
      $region37: #{tpu_custom_call.1} parent=5 // pred_check
        %p250 = pneg %p249
      $region38: #{tpu_custom_call.1} parent=5 // pred_check_branch
        %252 = sbr.rel (%p250) target = $region40
      $region39: #{tpu_custom_call.1} parent=5 // pred_region
        // Predicated region
        $region41: #{tpu_custom_call.1} parent=39 // pred_check
          %p253 = pneg %p40
        $region42: #{tpu_custom_call.1} parent=39 // pred_check_branch
          %255 = sbr.rel (%p253) target = $region44
        $region43: #{tpu_custom_call.1} parent=39 // pred_region
          %s256 = sand.u32 %s30, 1
          %s257 = scalar_lea.sflag [#allocation3], %s256
          %s258 = sand.u32 %s30, 1
          %s259 = smul.addr %s258, 64
          %s260 = scalar_lea.vmem [#allocation2], %s259
          %s261 = smul.u32 2, %s20
          %263 = vsyncadd %s257, 0
          %s264 = smul.addr %s261, 8
          %s265 = scalar_lea.hbm %s0, %s264
          %s266 = sshll.u32 %s265, 4
          %s267 = int_to_ptr.hbm [resolvable:$true] %s266
          %s268 = sshll.u32 %s260, 4
          %s269 = int_to_ptr.vmem [resolvable:$true] %s268
          %274 = dma.hbm_to_vmem [thread:$0]  %s267, 1024, %s269, %s257, 512, 256, 16
        $region44: #{tpu_custom_call.1} parent=39 // pred_fallthru
          _
      $region40: #{tpu_custom_call.1} parent=5 // pred_fallthru
        _
      %p275 = scmp.le.s32.totalorder 1, %s20
      %p276 = scmp.lt.s32.totalorder %s20, 3
      %p277 = pnand %p275, %p276
      %p278 = pneg %p277
      // Predicated region
      $region45: #{tpu_custom_call.1} parent=5 // pred_check
        _
      $region46: #{tpu_custom_call.1} parent=5 // pred_check_branch
        %280 = sbr.rel (%p277) target = $region48
      $region47: #{tpu_custom_call.1} parent=5 // pred_region
        %s281 = ssub.s32 %s20, 1
        %s282 = sand.u32 %s33, 1
        %s283 = scalar_lea.sflag [#allocation3], %s282
        %s284 = sand.u32 %s33, 1
        %s285 = smul.addr %s284, 64
        %s286 = scalar_lea.vmem [#allocation2], %s285
        // Predicated region
        $region49: #{tpu_custom_call.1} parent=47 // pred_check
          %p287 = pneg %p46
        $region50: #{tpu_custom_call.1} parent=47 // pred_check_branch
          %289 = sbr.rel (%p287) target = $region52
        $region51: #{tpu_custom_call.1} parent=47 // pred_region
          %291 = dma.done %s283, 1024
        $region52: #{tpu_custom_call.1} parent=47 // pred_fallthru
          _
        // Predicated region
        $region53: #{tpu_custom_call.1} parent=47 // pred_check
          %p292 = pneg %p67
        $region54: #{tpu_custom_call.1} parent=47 // pred_check_branch
          %294 = sbr.rel (%p292) target = $region56
        $region55: #{tpu_custom_call.1} parent=47 // pred_region
          %296 = dma.done [#allocation6], 128
        $region56: #{tpu_custom_call.1} parent=47 // pred_fallthru
          _
        // Predicated region
        $region57: #{tpu_custom_call.1} parent=47 // pred_check
          %p297 = pneg %p130
        $region58: #{tpu_custom_call.1} parent=47 // pred_check_branch
          %299 = sbr.rel (%p297) target = $region60
        $region59: #{tpu_custom_call.1} parent=47 // pred_region
          %301 = dma.done [#allocation6], 128
        $region60: #{tpu_custom_call.1} parent=47 // pred_fallthru
          _
        %s302 = sand.u32 %s33, 1
        %s303 = scalar_lea.sflag [#allocation3], %s302
        %s304 = sand.u32 %s33, 1
        %s305 = smul.addr %s304, 64
        %s306 = scalar_lea.vmem [#allocation2], %s305
        %p307 = pneg %p46
        %p308 = pneg %p43
        %p309 = pneg %p67
        %p310 = pneg %p64
        %p311 = pneg %p88
        %p312 = pneg %p85
        %p313 = pneg %p109
        %p314 = pneg %p106
        %p315 = pneg %p130
        %p316 = pneg %p127
        %p317 = pneg %p151
        %p318 = pneg %p148
        %p319 = pneg %p172
        %p320 = pneg %p169
        %p321 = pneg %p198
        %p322 = pneg %p195
        %s323 = sand.u32 %s185, 1
        %s324 = scalar_lea.sflag [#allocation4], %s323
        %s325 = sand.u32 %s185, 1
        %s326 = smul.addr %s325, 1600
        %s327 = scalar_lea.vmem [#allocation8], %s326
        %s328 = smul.u32 2, %s25
        %s329 = smul.u32 2, %s25
        %v330 = vld [vmem:[%s6] sm:$0xff]
        %v331 = vld [vmem:[%s6 + $0x8] sm:$0xff]
        %v332 = vld [vmem:[%s6 + $0x10] sm:$0xff]
        %v333 = vld [vmem:[%s6 + $0x18] sm:$0xff]
        %v334 = vld [vmem:[%s6 + $0x20] sm:$0xff]
        %v335 = vld [vmem:[%s6 + $0x28] sm:$0xff]
        %v336 = vld [vmem:[%s6 + $0x30] sm:$0xff]
        %v337 = vld [vmem:[%s6 + $0x38] sm:$0xff]
        %v338 = vld [vmem:[%s6 + $0x40] sm:$0xff]
        %v339 = vld [vmem:[%s6 + $0x48] sm:$0xff]
        %v340 = vld [vmem:[%s6 + $0x50] sm:$0xff]
        %v341 = vld [vmem:[%s6 + $0x58] sm:$0xff]
        %v342 = vld [vmem:[%s6 + $0x60] sm:$0xff]
        %v343 = vld [vmem:[%s6 + $0x68] sm:$0xff]
        %v344 = vld [vmem:[%s6 + $0x70] sm:$0xff]
        %v345 = vld [vmem:[%s6 + $0x78] sm:$0xff]
        %v346 = vld [vmem:[%s6 + $0x80] sm:$0xff]
        %v347 = vld [vmem:[%s6 + $0x88] sm:$0xff]
        %v348 = vld [vmem:[%s6 + $0x90] sm:$0xff]
        %v349 = vld [vmem:[%s286] sm:$0xff]
        %v350 = vld [vmem:[%s286 + $0x8] sm:$0xff]
        %v351 = vld [vmem:[%s286 + $0x10] sm:$0xff]
        %v352 = vld [vmem:[%s286 + $0x18] sm:$0xff]
        %v353 = vld [vmem:[%s286 + $0x20] sm:$0xff]
        %v354 = vld [vmem:[%s286 + $0x28] sm:$0xff]
        %v355 = vld [vmem:[%s286 + $0x30] sm:$0xff]
        %v356 = vld [vmem:[%s286 + $0x38] sm:$0xff]
        %v357 = vld [vmem:[#allocation5] sm:$0xff]
        %359 = vset.pattern.permute.xlu0 0
        %360 = vperm.xlu0 %359, %v330
        %v361 = vpop.permute.xlu0 %360
        %vm363 = vcmask 261120
        %v365 = vsel %vm363, %v357, 0
        %367 = vmatpush.msra.mxu0 0.0
        %368 = vmatpush.msra.mxu0 0.0
        %369 = vmatpush.msra.mxu0 0.0
        %370 = vmatpush.msra.mxu0 0.0
        %371 = vmatpush.msra.mxu0 0.0
        %372 = vmatpush.msra.mxu0 0.0
        %373 = vmatpush.msra.mxu0 0.0
        %374 = vmatpush.msra.mxu0 0.0
        %375 = vmatpush.msra.mxu0 0.0
        %376 = vmatpush.msra.mxu0 0.0
        %377 = vmatpush.msra.mxu0 0.0
        %378 = vmatpush.msra.mxu0 0.0
        %379 = vmatpush.msra.mxu0 %v355
        %380 = vmatpush.msra.mxu0 %v353
        %381 = vmatpush.msra.mxu0 %v351
        %382 = vmatpush.msra.mxu0 %v349
        %383 = vmatmul.f32.gmra.mxu0 %v365
        %v384 = vpop.f32.mrf.mxu0
        %v385 = vadd.f32 %v361, %v384
        %386 = vdwg.mxu0
        %387 = vmatpush.msra.mxu0 0.0
        %388 = vmatpush.msra.mxu0 0.0
        %389 = vmatpush.msra.mxu0 0.0
        %390 = vmatpush.msra.mxu0 0.0
        %391 = vmatpush.msra.mxu0 0.0
        %392 = vmatpush.msra.mxu0 0.0
        %393 = vmatpush.msra.mxu0 0.0
        %394 = vmatpush.msra.mxu0 0.0
        %395 = vmatpush.msra.mxu0 0.0
        %396 = vmatpush.msra.mxu0 0.0
        %397 = vmatpush.msra.mxu0 0.0
        %398 = vmatpush.msra.mxu0 0.0
        %399 = vmatpush.msra.mxu0 %v356
        %400 = vmatpush.msra.mxu0 %v354
        %401 = vmatpush.msra.mxu0 %v352
        %402 = vmatpush.msra.mxu0 %v350
        %403 = vmatmul.f32.gmra.mxu0 %v365
        %v404 = vpop.f32.mrf.mxu0
        %v405 = vadd.f32 %v361, %v404
        %406 = vdwg.mxu0
        %v407 = vmax.f32 %v385, 0.0
        %v408 = vmax.f32 %v405, 0.0
        %v409 = vld [vmem:[%s2] sm:$0xff]
        %v410 = vld [vmem:[%s2 + $0x8] sm:$0xff]
        %v411 = vld [vmem:[%s2 + $0x10] sm:$0xff]
        %v412 = vld [vmem:[%s2 + $0x18] sm:$0xff]
        %v413 = vld [vmem:[%s2 + $0x20] sm:$0xff]
        %v414 = vld [vmem:[%s2 + $0x28] sm:$0xff]
        %v415 = vld [vmem:[%s2 + $0x30] sm:$0xff]
        %v416 = vld [vmem:[%s2 + $0x38] sm:$0xff]
        %v417 = vld [vmem:[%s2 + $0x40] sm:$0xff]
        %419 = vset.pattern.permute.xlu0 0
        %420 = vperm.xlu0 %419, %v331
        %v421 = vpop.permute.xlu0 %420
        %424 = vset.pattern.permute.xlu0 0
        %425 = vperm.xlu0 %424, %v332
        %v426 = vpop.permute.xlu0 %425
        %429 = vset.pattern.permute.xlu0 0
        %430 = vperm.xlu0 %429, %v333
        %v431 = vpop.permute.xlu0 %430
        %434 = vset.pattern.permute.xlu0 0
        %435 = vperm.xlu0 %434, %v334
        %v436 = vpop.permute.xlu0 %435
        %439 = vset.pattern.permute.xlu0 0
        %440 = vperm.xlu0 %439, %v335
        %v441 = vpop.permute.xlu0 %440
        %444 = vset.pattern.permute.xlu0 0
        %445 = vperm.xlu0 %444, %v336
        %v446 = vpop.permute.xlu0 %445
        %449 = vset.pattern.permute.xlu0 0
        %450 = vperm.xlu0 %449, %v337
        %v451 = vpop.permute.xlu0 %450
        %454 = vset.pattern.permute.xlu0 0
        %455 = vperm.xlu0 %454, %v338
        %v456 = vpop.permute.xlu0 %455
        %459 = vset.pattern.permute.xlu0 0
        %460 = vperm.xlu0 %459, %v339
        %v461 = vpop.permute.xlu0 %460
        %vm463 = vcmask 64512
        %v465 = vsel %vm463, %v409, 0
        %v468 = vsel %vm463, %v410, 0
        %v471 = vsel %vm463, %v411, 0
        %v474 = vsel %vm463, %v412, 0
        %v477 = vsel %vm463, %v413, 0
        %v480 = vsel %vm463, %v414, 0
        %v483 = vsel %vm463, %v415, 0
        %v486 = vsel %vm463, %v416, 0
        %v489 = vsel %vm463, %v417, 0
        %491 = vmatpush.msra.mxu0 0.0
        %492 = vmatpush.msra.mxu0 0.0
        %493 = vmatpush.msra.mxu0 0.0
        %494 = vmatpush.msra.mxu0 0.0
        %495 = vmatpush.msra.mxu0 0.0
        %496 = vmatpush.msra.mxu0 0.0
        %497 = vmatpush.msra.mxu0 0.0
        %498 = vmatpush.msra.mxu0 0.0
        %499 = vmatpush.msra.mxu0 0.0
        %500 = vmatpush.msra.mxu0 0.0
        %501 = vmatpush.msra.mxu0 0.0
        %502 = vmatpush.msra.mxu0 0.0
        %503 = vmatpush.msra.mxu0 0.0
        %504 = vmatpush.msra.mxu0 0.0
        %505 = vmatpush.msra.mxu0 0.0
        %506 = vmatpush.msra.mxu0 %v407
        %507 = vmatmul.f32.gmra.mxu0 %v465
        %v508 = vpop.f32.mrf.mxu0
        %v509 = vadd.f32 %v421, %v508
        %510 = vmatmul.f32.gmra.mxu0 %v468
        %v511 = vpop.f32.mrf.mxu0
        %v512 = vadd.f32 %v426, %v511
        %513 = vmatmul.f32.gmra.mxu0 %v471
        %v514 = vpop.f32.mrf.mxu0
        %v515 = vadd.f32 %v431, %v514
        %516 = vmatmul.f32.gmra.mxu0 %v474
        %v517 = vpop.f32.mrf.mxu0
        %v518 = vadd.f32 %v436, %v517
        %519 = vmatmul.f32.gmra.mxu0 %v477
        %v520 = vpop.f32.mrf.mxu0
        %v521 = vadd.f32 %v441, %v520
        %522 = vmatmul.f32.gmra.mxu0 %v480
        %v523 = vpop.f32.mrf.mxu0
        %v524 = vadd.f32 %v446, %v523
        %525 = vmatmul.f32.gmra.mxu0 %v483
        %v526 = vpop.f32.mrf.mxu0
        %v527 = vadd.f32 %v451, %v526
        %528 = vmatmul.f32.gmra.mxu0 %v486
        %v529 = vpop.f32.mrf.mxu0
        %v530 = vadd.f32 %v456, %v529
        %531 = vmatmul.f32.gmra.mxu0 %v489
        %v532 = vpop.f32.mrf.mxu0
        %v533 = vadd.f32 %v461, %v532
        %534 = vdwg.mxu0
        %535 = vmatpush.msra.mxu0 0.0
        %536 = vmatpush.msra.mxu0 0.0
        %537 = vmatpush.msra.mxu0 0.0
        %538 = vmatpush.msra.mxu0 0.0
        %539 = vmatpush.msra.mxu0 0.0
        %540 = vmatpush.msra.mxu0 0.0
        %541 = vmatpush.msra.mxu0 0.0
        %542 = vmatpush.msra.mxu0 0.0
        %543 = vmatpush.msra.mxu0 0.0
        %544 = vmatpush.msra.mxu0 0.0
        %545 = vmatpush.msra.mxu0 0.0
        %546 = vmatpush.msra.mxu0 0.0
        %547 = vmatpush.msra.mxu0 0.0
        %548 = vmatpush.msra.mxu0 0.0
        %549 = vmatpush.msra.mxu0 0.0
        %550 = vmatpush.msra.mxu0 %v408
        %551 = vmatmul.f32.gmra.mxu0 %v465
        %v552 = vpop.f32.mrf.mxu0
        %v553 = vadd.f32 %v421, %v552
        %554 = vmatmul.f32.gmra.mxu0 %v468
        %v555 = vpop.f32.mrf.mxu0
        %v556 = vadd.f32 %v426, %v555
        %557 = vmatmul.f32.gmra.mxu0 %v471
        %v558 = vpop.f32.mrf.mxu0
        %v559 = vadd.f32 %v431, %v558
        %560 = vmatmul.f32.gmra.mxu0 %v474
        %v561 = vpop.f32.mrf.mxu0
        %v562 = vadd.f32 %v436, %v561
        %563 = vmatmul.f32.gmra.mxu0 %v477
        %v564 = vpop.f32.mrf.mxu0
        %v565 = vadd.f32 %v441, %v564
        %566 = vmatmul.f32.gmra.mxu0 %v480
        %v567 = vpop.f32.mrf.mxu0
        %v568 = vadd.f32 %v446, %v567
        %569 = vmatmul.f32.gmra.mxu0 %v483
        %v570 = vpop.f32.mrf.mxu0
        %v571 = vadd.f32 %v451, %v570
        %572 = vmatmul.f32.gmra.mxu0 %v486
        %v573 = vpop.f32.mrf.mxu0
        %v574 = vadd.f32 %v456, %v573
        %575 = vmatmul.f32.gmra.mxu0 %v489
        %v576 = vpop.f32.mrf.mxu0
        %v577 = vadd.f32 %v461, %v576
        %578 = vdwg.mxu0
        %v579 = vmax.f32 %v509, 0.0
        %v580 = vmax.f32 %v553, 0.0
        %v581 = vmax.f32 %v512, 0.0
        %v582 = vmax.f32 %v556, 0.0
        %v583 = vmax.f32 %v515, 0.0
        %v584 = vmax.f32 %v559, 0.0
        %v585 = vmax.f32 %v518, 0.0
        %v586 = vmax.f32 %v562, 0.0
        %v587 = vmax.f32 %v521, 0.0
        %v588 = vmax.f32 %v565, 0.0
        %v589 = vmax.f32 %v524, 0.0
        %v590 = vmax.f32 %v568, 0.0
        %v591 = vmax.f32 %v527, 0.0
        %v592 = vmax.f32 %v571, 0.0
        %v593 = vmax.f32 %v530, 0.0
        %v594 = vmax.f32 %v574, 0.0
        %v595 = vmax.f32 %v533, 0.0
        %v596 = vmax.f32 %v577, 0.0
        %v597 = vld [vmem:[%s3] sm:$0xff]
        %v598 = vld [vmem:[%s3 + $0x8] sm:$0xff]
        %v599 = vld [vmem:[%s3 + $0x10] sm:$0xff]
        %v600 = vld [vmem:[%s3 + $0x18] sm:$0xff]
        %v601 = vld [vmem:[%s3 + $0x20] sm:$0xff]
        %v602 = vld [vmem:[%s3 + $0x28] sm:$0xff]
        %v603 = vld [vmem:[%s3 + $0x30] sm:$0xff]
        %v604 = vld [vmem:[%s3 + $0x38] sm:$0xff]
        %v605 = vld [vmem:[%s3 + $0x40] sm:$0xff]
        %v606 = vld [vmem:[%s3 + $0x48] sm:$0xff]
        %v607 = vld [vmem:[%s3 + $0x50] sm:$0xff]
        %v608 = vld [vmem:[%s3 + $0x58] sm:$0xff]
        %v609 = vld [vmem:[%s3 + $0x60] sm:$0xff]
        %v610 = vld [vmem:[%s3 + $0x68] sm:$0xff]
        %v611 = vld [vmem:[%s3 + $0x70] sm:$0xff]
        %v612 = vld [vmem:[%s3 + $0x78] sm:$0xff]
        %v613 = vld [vmem:[%s3 + $0x80] sm:$0xff]
        %v614 = vld [vmem:[%s3 + $0x88] sm:$0xff]
        %v615 = vld [vmem:[%s3 + $0x90] sm:$0xff]
        %v616 = vld [vmem:[%s3 + $0x98] sm:$0xff]
        %v617 = vld [vmem:[%s3 + $0xa0] sm:$0xff]
        %v618 = vld [vmem:[%s3 + $0xa8] sm:$0xff]
        %v619 = vld [vmem:[%s3 + $0xb0] sm:$0xff]
        %v620 = vld [vmem:[%s3 + $0xb8] sm:$0xff]
        %v621 = vld [vmem:[%s3 + $0xc0] sm:$0xff]
        %v622 = vld [vmem:[%s3 + $0xc8] sm:$0xff]
        %v623 = vld [vmem:[%s3 + $0xd0] sm:$0xff]
        %v624 = vld [vmem:[%s3 + $0xd8] sm:$0xff]
        %v625 = vld [vmem:[%s3 + $0xe0] sm:$0xff]
        %v626 = vld [vmem:[%s3 + $0xe8] sm:$0xff]
        %v627 = vld [vmem:[%s3 + $0xf0] sm:$0xff]
        %v628 = vld [vmem:[%s3 + $0xf8] sm:$0xff]
        %v629 = vld [vmem:[%s3 + $0x100] sm:$0xff]
        %v630 = vld [vmem:[%s3 + $0x108] sm:$0xff]
        %v631 = vld [vmem:[%s3 + $0x110] sm:$0xff]
        %v632 = vld [vmem:[%s3 + $0x118] sm:$0xff]
        %vm633 = vcmask 588800
        %v635 = vsel %vm633, %v597, 0
        %v638 = vsel %vm633, %v598, 0
        %v641 = vsel %vm633, %v599, 0
        %v644 = vsel %vm633, %v600, 0
        %v647 = vsel %vm633, %v601, 0
        %v650 = vsel %vm633, %v602, 0
        %v653 = vsel %vm633, %v603, 0
        %v656 = vsel %vm633, %v604, 0
        %v659 = vsel %vm633, %v605, 0
        %v662 = vsel %vm633, %v606, 0
        %v665 = vsel %vm633, %v607, 0
        %v668 = vsel %vm633, %v608, 0
        %v671 = vsel %vm633, %v609, 0
        %v674 = vsel %vm633, %v610, 0
        %v677 = vsel %vm633, %v611, 0
        %v680 = vsel %vm633, %v612, 0
        %v683 = vsel %vm633, %v613, 0
        %v686 = vsel %vm633, %v614, 0
        %v689 = vsel %vm633, %v615, 0
        %v692 = vsel %vm633, %v616, 0
        %v695 = vsel %vm633, %v617, 0
        %v698 = vsel %vm633, %v618, 0
        %v701 = vsel %vm633, %v619, 0
        %v704 = vsel %vm633, %v620, 0
        %v707 = vsel %vm633, %v621, 0
        %v710 = vsel %vm633, %v622, 0
        %v713 = vsel %vm633, %v623, 0
        %v716 = vsel %vm633, %v624, 0
        %v719 = vsel %vm633, %v625, 0
        %v722 = vsel %vm633, %v626, 0
        %v725 = vsel %vm633, %v627, 0
        %v728 = vsel %vm633, %v628, 0
        %v731 = vsel %vm633, %v629, 0
        %v734 = vsel %vm633, %v630, 0
        %v737 = vsel %vm633, %v631, 0
        %v740 = vsel %vm633, %v632, 0
        %742 = vmatpush.msra.mxu0 0.0
        %743 = vmatpush.msra.mxu0 0.0
        %744 = vmatpush.msra.mxu0 0.0
        %745 = vmatpush.msra.mxu0 0.0
        %746 = vmatpush.msra.mxu0 0.0
        %747 = vmatpush.msra.mxu0 0.0
        %748 = vmatpush.msra.mxu0 0.0
        %749 = vmatpush.msra.mxu0 %v595
        %750 = vmatpush.msra.mxu0 %v593
        %751 = vmatpush.msra.mxu0 %v591
        %752 = vmatpush.msra.mxu0 %v589
        %753 = vmatpush.msra.mxu0 %v587
        %754 = vmatpush.msra.mxu0 %v585
        %755 = vmatpush.msra.mxu0 %v583
        %756 = vmatpush.msra.mxu0 %v581
        %757 = vmatpush.msra.mxu0 %v579
        %758 = vmatmul.f32.gmra.mxu0 %v635
        %v759 = vpop.f32.mrf.mxu0
        %v760 = vadd.f32 0.0, %v759
        %761 = vmatmul.f32.gmra.mxu0 %v638
        %v762 = vpop.f32.mrf.mxu0
        %v763 = vadd.f32 0.0, %v762
        %764 = vmatmul.f32.gmra.mxu0 %v641
        %v765 = vpop.f32.mrf.mxu0
        %v766 = vadd.f32 0.0, %v765
        %767 = vmatmul.f32.gmra.mxu0 %v644
        %v768 = vpop.f32.mrf.mxu0
        %v769 = vadd.f32 0.0, %v768
        %770 = vmatmul.f32.gmra.mxu0 %v647
        %v771 = vpop.f32.mrf.mxu0
        %v772 = vadd.f32 0.0, %v771
        %773 = vmatmul.f32.gmra.mxu0 %v650
        %v774 = vpop.f32.mrf.mxu0
        %v775 = vadd.f32 0.0, %v774
        %776 = vmatmul.f32.gmra.mxu0 %v653
        %v777 = vpop.f32.mrf.mxu0
        %v778 = vadd.f32 0.0, %v777
        %779 = vmatmul.f32.gmra.mxu0 %v656
        %v780 = vpop.f32.mrf.mxu0
        %v781 = vadd.f32 0.0, %v780
        %782 = vmatmul.f32.gmra.mxu0 %v659
        %v783 = vpop.f32.mrf.mxu0
        %v784 = vadd.f32 0.0, %v783
        %785 = vmatmul.f32.gmra.mxu0 %v662
        %v786 = vpop.f32.mrf.mxu0
        %v787 = vadd.f32 0.0, %v786
        %788 = vmatmul.f32.gmra.mxu0 %v665
        %v789 = vpop.f32.mrf.mxu0
        %v790 = vadd.f32 0.0, %v789
        %791 = vmatmul.f32.gmra.mxu0 %v668
        %v792 = vpop.f32.mrf.mxu0
        %v793 = vadd.f32 0.0, %v792
        %794 = vmatmul.f32.gmra.mxu0 %v671
        %v795 = vpop.f32.mrf.mxu0
        %v796 = vadd.f32 0.0, %v795
        %797 = vmatmul.f32.gmra.mxu0 %v674
        %v798 = vpop.f32.mrf.mxu0
        %v799 = vadd.f32 0.0, %v798
        %800 = vmatmul.f32.gmra.mxu0 %v677
        %v801 = vpop.f32.mrf.mxu0
        %v802 = vadd.f32 0.0, %v801
        %803 = vmatmul.f32.gmra.mxu0 %v680
        %v804 = vpop.f32.mrf.mxu0
        %v805 = vadd.f32 0.0, %v804
        %806 = vmatmul.f32.gmra.mxu0 %v683
        %v807 = vpop.f32.mrf.mxu0
        %v808 = vadd.f32 0.0, %v807
        %809 = vmatmul.f32.gmra.mxu0 %v686
        %v810 = vpop.f32.mrf.mxu0
        %v811 = vadd.f32 0.0, %v810
        %812 = vmatmul.f32.gmra.mxu0 %v689
        %v813 = vpop.f32.mrf.mxu0
        %v814 = vadd.f32 0.0, %v813
        %815 = vmatmul.f32.gmra.mxu0 %v692
        %v816 = vpop.f32.mrf.mxu0
        %v817 = vadd.f32 0.0, %v816
        %818 = vmatmul.f32.gmra.mxu0 %v695
        %v819 = vpop.f32.mrf.mxu0
        %v820 = vadd.f32 0.0, %v819
        %821 = vmatmul.f32.gmra.mxu0 %v698
        %v822 = vpop.f32.mrf.mxu0
        %v823 = vadd.f32 0.0, %v822
        %824 = vmatmul.f32.gmra.mxu0 %v701
        %v825 = vpop.f32.mrf.mxu0
        %v826 = vadd.f32 0.0, %v825
        %827 = vmatmul.f32.gmra.mxu0 %v704
        %v828 = vpop.f32.mrf.mxu0
        %v829 = vadd.f32 0.0, %v828
        %830 = vmatmul.f32.gmra.mxu0 %v707
        %v831 = vpop.f32.mrf.mxu0
        %v832 = vadd.f32 0.0, %v831
        %833 = vmatmul.f32.gmra.mxu0 %v710
        %v834 = vpop.f32.mrf.mxu0
        %v835 = vadd.f32 0.0, %v834
        %836 = vmatmul.f32.gmra.mxu0 %v713
        %v837 = vpop.f32.mrf.mxu0
        %v838 = vadd.f32 0.0, %v837
        %839 = vmatmul.f32.gmra.mxu0 %v716
        %v840 = vpop.f32.mrf.mxu0
        %v841 = vadd.f32 0.0, %v840
        %842 = vmatmul.f32.gmra.mxu0 %v719
        %v843 = vpop.f32.mrf.mxu0
        %v844 = vadd.f32 0.0, %v843
        %845 = vmatmul.f32.gmra.mxu0 %v722
        %v846 = vpop.f32.mrf.mxu0
        %v847 = vadd.f32 0.0, %v846
        %848 = vmatmul.f32.gmra.mxu0 %v725
        %v849 = vpop.f32.mrf.mxu0
        %v850 = vadd.f32 0.0, %v849
        %851 = vmatmul.f32.gmra.mxu0 %v728
        %v852 = vpop.f32.mrf.mxu0
        %v853 = vadd.f32 0.0, %v852
        %854 = vmatmul.f32.gmra.mxu0 %v731
        %v855 = vpop.f32.mrf.mxu0
        %v856 = vadd.f32 0.0, %v855
        %857 = vmatmul.f32.gmra.mxu0 %v734
        %v858 = vpop.f32.mrf.mxu0
        %v859 = vadd.f32 0.0, %v858
        %860 = vmatmul.f32.gmra.mxu0 %v737
        %v861 = vpop.f32.mrf.mxu0
        %v862 = vadd.f32 0.0, %v861
        %863 = vmatmul.f32.gmra.mxu0 %v740
        %v864 = vpop.f32.mrf.mxu0
        %v865 = vadd.f32 0.0, %v864
        %866 = vdwg.mxu0
        %867 = vmatpush.msra.mxu0 0.0
        %868 = vmatpush.msra.mxu0 0.0
        %869 = vmatpush.msra.mxu0 0.0
        %870 = vmatpush.msra.mxu0 0.0
        %871 = vmatpush.msra.mxu0 0.0
        %872 = vmatpush.msra.mxu0 0.0
        %873 = vmatpush.msra.mxu0 0.0
        %874 = vmatpush.msra.mxu0 %v596
        %875 = vmatpush.msra.mxu0 %v594
        %876 = vmatpush.msra.mxu0 %v592
        %877 = vmatpush.msra.mxu0 %v590
        %878 = vmatpush.msra.mxu0 %v588
        %879 = vmatpush.msra.mxu0 %v586
        %880 = vmatpush.msra.mxu0 %v584
        %881 = vmatpush.msra.mxu0 %v582
        %882 = vmatpush.msra.mxu0 %v580
        %883 = vmatmul.f32.gmra.mxu0 %v635
        %v884 = vpop.f32.mrf.mxu0
        %v885 = vadd.f32 0.0, %v884
        %886 = vmatmul.f32.gmra.mxu0 %v638
        %v887 = vpop.f32.mrf.mxu0
        %v888 = vadd.f32 0.0, %v887
        %889 = vmatmul.f32.gmra.mxu0 %v641
        %v890 = vpop.f32.mrf.mxu0
        %v891 = vadd.f32 0.0, %v890
        %892 = vmatmul.f32.gmra.mxu0 %v644
        %v893 = vpop.f32.mrf.mxu0
        %v894 = vadd.f32 0.0, %v893
        %895 = vmatmul.f32.gmra.mxu0 %v647
        %v896 = vpop.f32.mrf.mxu0
        %v897 = vadd.f32 0.0, %v896
        %898 = vmatmul.f32.gmra.mxu0 %v650
        %v899 = vpop.f32.mrf.mxu0
        %v900 = vadd.f32 0.0, %v899
        %901 = vmatmul.f32.gmra.mxu0 %v653
        %v902 = vpop.f32.mrf.mxu0
        %v903 = vadd.f32 0.0, %v902
        %904 = vmatmul.f32.gmra.mxu0 %v656
        %v905 = vpop.f32.mrf.mxu0
        %v906 = vadd.f32 0.0, %v905
        %907 = vmatmul.f32.gmra.mxu0 %v659
        %v908 = vpop.f32.mrf.mxu0
        %v909 = vadd.f32 0.0, %v908
        %910 = vmatmul.f32.gmra.mxu0 %v662
        %v911 = vpop.f32.mrf.mxu0
        %v912 = vadd.f32 0.0, %v911
        %913 = vmatmul.f32.gmra.mxu0 %v665
        %v914 = vpop.f32.mrf.mxu0
        %v915 = vadd.f32 0.0, %v914
        %916 = vmatmul.f32.gmra.mxu0 %v668
        %v917 = vpop.f32.mrf.mxu0
        %v918 = vadd.f32 0.0, %v917
        %919 = vmatmul.f32.gmra.mxu0 %v671
        %v920 = vpop.f32.mrf.mxu0
        %v921 = vadd.f32 0.0, %v920
        %922 = vmatmul.f32.gmra.mxu0 %v674
        %v923 = vpop.f32.mrf.mxu0
        %v924 = vadd.f32 0.0, %v923
        %925 = vmatmul.f32.gmra.mxu0 %v677
        %v926 = vpop.f32.mrf.mxu0
        %v927 = vadd.f32 0.0, %v926
        %928 = vmatmul.f32.gmra.mxu0 %v680
        %v929 = vpop.f32.mrf.mxu0
        %v930 = vadd.f32 0.0, %v929
        %931 = vmatmul.f32.gmra.mxu0 %v683
        %v932 = vpop.f32.mrf.mxu0
        %v933 = vadd.f32 0.0, %v932
        %934 = vmatmul.f32.gmra.mxu0 %v686
        %v935 = vpop.f32.mrf.mxu0
        %v936 = vadd.f32 0.0, %v935
        %937 = vmatmul.f32.gmra.mxu0 %v689
        %v938 = vpop.f32.mrf.mxu0
        %v939 = vadd.f32 0.0, %v938
        %940 = vmatmul.f32.gmra.mxu0 %v692
        %v941 = vpop.f32.mrf.mxu0
        %v942 = vadd.f32 0.0, %v941
        %943 = vmatmul.f32.gmra.mxu0 %v695
        %v944 = vpop.f32.mrf.mxu0
        %v945 = vadd.f32 0.0, %v944
        %946 = vmatmul.f32.gmra.mxu0 %v698
        %v947 = vpop.f32.mrf.mxu0
        %v948 = vadd.f32 0.0, %v947
        %949 = vmatmul.f32.gmra.mxu0 %v701
        %v950 = vpop.f32.mrf.mxu0
        %v951 = vadd.f32 0.0, %v950
        %952 = vmatmul.f32.gmra.mxu0 %v704
        %v953 = vpop.f32.mrf.mxu0
        %v954 = vadd.f32 0.0, %v953
        %955 = vmatmul.f32.gmra.mxu0 %v707
        %v956 = vpop.f32.mrf.mxu0
        %v957 = vadd.f32 0.0, %v956
        %958 = vmatmul.f32.gmra.mxu0 %v710
        %v959 = vpop.f32.mrf.mxu0
        %v960 = vadd.f32 0.0, %v959
        %961 = vmatmul.f32.gmra.mxu0 %v713
        %v962 = vpop.f32.mrf.mxu0
        %v963 = vadd.f32 0.0, %v962
        %964 = vmatmul.f32.gmra.mxu0 %v716
        %v965 = vpop.f32.mrf.mxu0
        %v966 = vadd.f32 0.0, %v965
        %967 = vmatmul.f32.gmra.mxu0 %v719
        %v968 = vpop.f32.mrf.mxu0
        %v969 = vadd.f32 0.0, %v968
        %970 = vmatmul.f32.gmra.mxu0 %v722
        %v971 = vpop.f32.mrf.mxu0
        %v972 = vadd.f32 0.0, %v971
        %973 = vmatmul.f32.gmra.mxu0 %v725
        %v974 = vpop.f32.mrf.mxu0
        %v975 = vadd.f32 0.0, %v974
        %976 = vmatmul.f32.gmra.mxu0 %v728
        %v977 = vpop.f32.mrf.mxu0
        %v978 = vadd.f32 0.0, %v977
        %979 = vmatmul.f32.gmra.mxu0 %v731
        %v980 = vpop.f32.mrf.mxu0
        %v981 = vadd.f32 0.0, %v980
        %982 = vmatmul.f32.gmra.mxu0 %v734
        %v983 = vpop.f32.mrf.mxu0
        %v984 = vadd.f32 0.0, %v983
        %985 = vmatmul.f32.gmra.mxu0 %v737
        %v986 = vpop.f32.mrf.mxu0
        %v987 = vadd.f32 0.0, %v986
        %988 = vmatmul.f32.gmra.mxu0 %v740
        %v989 = vpop.f32.mrf.mxu0
        %v990 = vadd.f32 0.0, %v989
        %991 = vdwg.mxu0
        %v992 = vadd.f32 %v760, %v772
        %v993 = vadd.f32 %v885, %v897
        %v994 = vadd.f32 %v763, %v775
        %v995 = vadd.f32 %v888, %v900
        %v996 = vadd.f32 %v766, %v778
        %v997 = vadd.f32 %v891, %v903
        %v998 = vadd.f32 %v769, %v781
        %v999 = vadd.f32 %v894, %v906
        %v1000 = vadd.f32 %v992, %v784
        %v1001 = vadd.f32 %v993, %v909
        %v1002 = vadd.f32 %v994, %v787
        %v1003 = vadd.f32 %v995, %v912
        %v1004 = vadd.f32 %v996, %v790
        %v1005 = vadd.f32 %v997, %v915
        %v1006 = vadd.f32 %v998, %v793
        %v1007 = vadd.f32 %v999, %v918
        %v1008 = vadd.f32 %v1000, %v796
        %v1009 = vadd.f32 %v1001, %v921
        %v1010 = vadd.f32 %v1002, %v799
        %v1011 = vadd.f32 %v1003, %v924
        %v1012 = vadd.f32 %v1004, %v802
        %v1013 = vadd.f32 %v1005, %v927
        %v1014 = vadd.f32 %v1006, %v805
        %v1015 = vadd.f32 %v1007, %v930
        %v1016 = vadd.f32 %v1008, %v808
        %v1017 = vadd.f32 %v1009, %v933
        %v1018 = vadd.f32 %v1010, %v811
        %v1019 = vadd.f32 %v1011, %v936
        %v1020 = vadd.f32 %v1012, %v814
        %v1021 = vadd.f32 %v1013, %v939
        %v1022 = vadd.f32 %v1014, %v817
        %v1023 = vadd.f32 %v1015, %v942
        %v1024 = vadd.f32 %v1016, %v820
        %v1025 = vadd.f32 %v1017, %v945
        %v1026 = vadd.f32 %v1018, %v823
        %v1027 = vadd.f32 %v1019, %v948
        %v1028 = vadd.f32 %v1020, %v826
        %v1029 = vadd.f32 %v1021, %v951
        %v1030 = vadd.f32 %v1022, %v829
        %v1031 = vadd.f32 %v1023, %v954
        %v1032 = vadd.f32 %v1024, %v832
        %v1033 = vadd.f32 %v1025, %v957
        %v1034 = vadd.f32 %v1026, %v835
        %v1035 = vadd.f32 %v1027, %v960
        %v1036 = vadd.f32 %v1028, %v838
        %v1037 = vadd.f32 %v1029, %v963
        %v1038 = vadd.f32 %v1030, %v841
        %v1039 = vadd.f32 %v1031, %v966
        %v1040 = vadd.f32 %v1032, %v844
        %v1041 = vadd.f32 %v1033, %v969
        %v1042 = vadd.f32 %v1034, %v847
        %v1043 = vadd.f32 %v1035, %v972
        %v1044 = vadd.f32 %v1036, %v850
        %v1045 = vadd.f32 %v1037, %v975
        %v1046 = vadd.f32 %v1038, %v853
        %v1047 = vadd.f32 %v1039, %v978
        %v1048 = vadd.f32 %v1040, %v856
        %v1049 = vadd.f32 %v1041, %v981
        %v1050 = vadd.f32 %v1042, %v859
        %v1051 = vadd.f32 %v1043, %v984
        %v1052 = vadd.f32 %v1044, %v862
        %v1053 = vadd.f32 %v1045, %v987
        %v1054 = vadd.f32 %v1046, %v865
        %v1055 = vadd.f32 %v1047, %v990
        %v1056 = vmul.f32 %v1048, 0.04
        %v1057 = vmul.f32 %v1049, 0.04
        %v1058 = vmul.f32 %v1050, 0.04
        %v1059 = vmul.f32 %v1051, 0.04
        %v1060 = vmul.f32 %v1052, 0.04
        %v1061 = vmul.f32 %v1053, 0.04
        %v1062 = vmul.f32 %v1054, 0.04
        %v1063 = vmul.f32 %v1055, 0.04
        %1065 = vset.pattern.permute.xlu0 0
        %1066 = vperm.xlu0 %1065, %v340
        %v1067 = vpop.permute.xlu0 %1066
        %1070 = vset.pattern.permute.xlu0 0
        %1071 = vperm.xlu0 %1070, %v341
        %v1072 = vpop.permute.xlu0 %1071
        %1075 = vset.pattern.permute.xlu0 0
        %1076 = vperm.xlu0 %1075, %v342
        %v1077 = vpop.permute.xlu0 %1076
        %1080 = vset.pattern.permute.xlu0 0
        %1081 = vperm.xlu0 %1080, %v343
        %v1082 = vpop.permute.xlu0 %1081
        %v1084 = vadd.f32 %v1056, %v1067
        %v1085 = vadd.f32 %v1057, %v1067
        %v1086 = vadd.f32 %v1058, %v1072
        %v1087 = vadd.f32 %v1059, %v1072
        %v1088 = vadd.f32 %v1060, %v1077
        %v1089 = vadd.f32 %v1061, %v1077
        %v1090 = vadd.f32 %v1062, %v1082
        %v1091 = vadd.f32 %v1063, %v1082
        %v1092 = vld [vmem:[#allocation7] sm:$0xff]
        %1094 = vset.pattern.permute.xlu0 0
        %1095 = vperm.xlu0 %1094, %v344
        %v1096 = vpop.permute.xlu0 %1095
        %v1099 = vsel %vm363, %v1092, 0
        %1101 = vmatpush.msra.mxu0 0.0
        %1102 = vmatpush.msra.mxu0 0.0
        %1103 = vmatpush.msra.mxu0 0.0
        %1104 = vmatpush.msra.mxu0 0.0
        %1105 = vmatpush.msra.mxu0 0.0
        %1106 = vmatpush.msra.mxu0 0.0
        %1107 = vmatpush.msra.mxu0 0.0
        %1108 = vmatpush.msra.mxu0 0.0
        %1109 = vmatpush.msra.mxu0 0.0
        %1110 = vmatpush.msra.mxu0 0.0
        %1111 = vmatpush.msra.mxu0 0.0
        %1112 = vmatpush.msra.mxu0 0.0
        %1113 = vmatpush.msra.mxu0 %v1090
        %1114 = vmatpush.msra.mxu0 %v1088
        %1115 = vmatpush.msra.mxu0 %v1086
        %1116 = vmatpush.msra.mxu0 %v1084
        %1117 = vmatmul.f32.gmra.mxu0 %v1099
        %v1118 = vpop.f32.mrf.mxu0
        %v1119 = vadd.f32 %v1096, %v1118
        %1120 = vdwg.mxu0
        %1121 = vmatpush.msra.mxu0 0.0
        %1122 = vmatpush.msra.mxu0 0.0
        %1123 = vmatpush.msra.mxu0 0.0
        %1124 = vmatpush.msra.mxu0 0.0
        %1125 = vmatpush.msra.mxu0 0.0
        %1126 = vmatpush.msra.mxu0 0.0
        %1127 = vmatpush.msra.mxu0 0.0
        %1128 = vmatpush.msra.mxu0 0.0
        %1129 = vmatpush.msra.mxu0 0.0
        %1130 = vmatpush.msra.mxu0 0.0
        %1131 = vmatpush.msra.mxu0 0.0
        %1132 = vmatpush.msra.mxu0 0.0
        %1133 = vmatpush.msra.mxu0 %v1091
        %1134 = vmatpush.msra.mxu0 %v1089
        %1135 = vmatpush.msra.mxu0 %v1087
        %1136 = vmatpush.msra.mxu0 %v1085
        %1137 = vmatmul.f32.gmra.mxu0 %v1099
        %v1138 = vpop.f32.mrf.mxu0
        %v1139 = vadd.f32 %v1096, %v1138
        %1140 = vdwg.mxu0
        %v1141 = vmax.f32 %v1119, 0.0
        %v1142 = vmax.f32 %v1139, 0.0
        %v1143 = vld [vmem:[%s5] sm:$0xff]
        %v1144 = vld [vmem:[%s5 + $0x8] sm:$0xff]
        %v1145 = vld [vmem:[%s5 + $0x10] sm:$0xff]
        %v1146 = vld [vmem:[%s5 + $0x18] sm:$0xff]
        %1148 = vset.pattern.permute.xlu0 0
        %1149 = vperm.xlu0 %1148, %v345
        %v1150 = vpop.permute.xlu0 %1149
        %1153 = vset.pattern.permute.xlu0 0
        %1154 = vperm.xlu0 %1153, %v346
        %v1155 = vpop.permute.xlu0 %1154
        %1158 = vset.pattern.permute.xlu0 0
        %1159 = vperm.xlu0 %1158, %v347
        %v1160 = vpop.permute.xlu0 %1159
        %1163 = vset.pattern.permute.xlu0 0
        %1164 = vperm.xlu0 %1163, %v348
        %v1165 = vpop.permute.xlu0 %1164
        %v1168 = vsel %vm463, %v1143, 0
        %v1171 = vsel %vm463, %v1144, 0
        %v1174 = vsel %vm463, %v1145, 0
        %v1177 = vsel %vm463, %v1146, 0
        %1179 = vmatpush.msra.mxu0 0.0
        %1180 = vmatpush.msra.mxu0 0.0
        %1181 = vmatpush.msra.mxu0 0.0
        %1182 = vmatpush.msra.mxu0 0.0
        %1183 = vmatpush.msra.mxu0 0.0
        %1184 = vmatpush.msra.mxu0 0.0
        %1185 = vmatpush.msra.mxu0 0.0
        %1186 = vmatpush.msra.mxu0 0.0
        %1187 = vmatpush.msra.mxu0 0.0
        %1188 = vmatpush.msra.mxu0 0.0
        %1189 = vmatpush.msra.mxu0 0.0
        %1190 = vmatpush.msra.mxu0 0.0
        %1191 = vmatpush.msra.mxu0 0.0
        %1192 = vmatpush.msra.mxu0 0.0
        %1193 = vmatpush.msra.mxu0 0.0
        %1194 = vmatpush.msra.mxu0 %v1141
        %1195 = vmatmul.f32.gmra.mxu0 %v1168
        %v1196 = vpop.f32.mrf.mxu0
        %v1197 = vadd.f32 %v1150, %v1196
        %1198 = vmatmul.f32.gmra.mxu0 %v1171
        %v1199 = vpop.f32.mrf.mxu0
        %v1200 = vadd.f32 %v1155, %v1199
        %1201 = vmatmul.f32.gmra.mxu0 %v1174
        %v1202 = vpop.f32.mrf.mxu0
        %v1203 = vadd.f32 %v1160, %v1202
        %1204 = vmatmul.f32.gmra.mxu0 %v1177
        %v1205 = vpop.f32.mrf.mxu0
        %v1206 = vadd.f32 %v1165, %v1205
        %1207 = vdwg.mxu0
        %1208 = vmatpush.msra.mxu0 0.0
        %1209 = vmatpush.msra.mxu0 0.0
        %1210 = vmatpush.msra.mxu0 0.0
        %1211 = vmatpush.msra.mxu0 0.0
        %1212 = vmatpush.msra.mxu0 0.0
        %1213 = vmatpush.msra.mxu0 0.0
        %1214 = vmatpush.msra.mxu0 0.0
        %1215 = vmatpush.msra.mxu0 0.0
        %1216 = vmatpush.msra.mxu0 0.0
        %1217 = vmatpush.msra.mxu0 0.0
        %1218 = vmatpush.msra.mxu0 0.0
        %1219 = vmatpush.msra.mxu0 0.0
        %1220 = vmatpush.msra.mxu0 0.0
        %1221 = vmatpush.msra.mxu0 0.0
        %1222 = vmatpush.msra.mxu0 0.0
        %1223 = vmatpush.msra.mxu0 %v1142
        %1224 = vmatmul.f32.gmra.mxu0 %v1168
        %v1225 = vpop.f32.mrf.mxu0
        %v1226 = vadd.f32 %v1150, %v1225
        %1227 = vmatmul.f32.gmra.mxu0 %v1171
        %v1228 = vpop.f32.mrf.mxu0
        %v1229 = vadd.f32 %v1155, %v1228
        %1230 = vmatmul.f32.gmra.mxu0 %v1174
        %v1231 = vpop.f32.mrf.mxu0
        %v1232 = vadd.f32 %v1160, %v1231
        %1233 = vmatmul.f32.gmra.mxu0 %v1177
        %v1234 = vpop.f32.mrf.mxu0
        %v1235 = vadd.f32 %v1165, %v1234
        %1236 = vdwg.mxu0
        %v1237 = vsub.f32 0.0, %v1197
        %v1238 = vsub.f32 0.0, %v1226
        %v1239 = vsub.f32 0.0, %v1200
        %v1240 = vsub.f32 0.0, %v1229
        %v1241 = vsub.f32 0.0, %v1203
        %v1242 = vsub.f32 0.0, %v1232
        %v1243 = vsub.f32 0.0, %v1206
        %v1244 = vsub.f32 0.0, %v1235
        %v1245 = vmul.f32 %v1237, 1.442695
        %v1246 = vpow.pop %v1245
        %v1247 = vmul.f32 %v1238, 1.442695
        %v1248 = vpow.pop %v1247
        %v1249 = vmul.f32 %v1239, 1.442695
        %v1250 = vpow.pop %v1249
        %v1251 = vmul.f32 %v1240, 1.442695
        %v1252 = vpow.pop %v1251
        %v1253 = vmul.f32 %v1241, 1.442695
        %v1254 = vpow.pop %v1253
        %v1255 = vmul.f32 %v1242, 1.442695
        %v1256 = vpow.pop %v1255
        %v1257 = vmul.f32 %v1243, 1.442695
        %v1258 = vpow.pop %v1257
        %v1259 = vmul.f32 %v1244, 1.442695
        %v1260 = vpow.pop %v1259
        %v1261 = vadd.f32 %v1246, 1.0
        %v1262 = vadd.f32 %v1248, 1.0
        %v1263 = vadd.f32 %v1250, 1.0
        %v1264 = vadd.f32 %v1252, 1.0
        %v1265 = vadd.f32 %v1254, 1.0
        %v1266 = vadd.f32 %v1256, 1.0
        %v1267 = vadd.f32 %v1258, 1.0
        %v1268 = vadd.f32 %v1260, 1.0
        %v1269 = vrcp.pop %v1261
        %v1270 = vmul.f32 %v1261, %v1269
        %v1271 = vsub.f32 1.0, %v1270
        %v1272 = vmul.f32 %v1269, %v1271
        %v1273 = vadd.f32 %v1269, %v1272
        %vm1274 = vweird.f32 %v1261
        %vm1275 = vweird.f32 %v1269
        %vm1276 = vmor %vm1274, %vm1275
        %v1277 = vsel %vm1276, %v1269, %v1273
        %v1278 = vand.u32 2147483647, %v1261
        %vm1279 = vcmp.eq.f32.partialorder %v1278, 8.507059e+37
        %v1280 = vand.u32 %v1261, 2147483648
        %v1281 = vor.u32 1.1754944e-38, %v1280
        %v1282 = vsel %vm1279, %v1281, %v1277
        %v1283 = vmul.f32 1.0, %v1282
        %v1284 = vrcp.pop %v1262
        %v1285 = vmul.f32 %v1262, %v1284
        %v1286 = vsub.f32 1.0, %v1285
        %v1287 = vmul.f32 %v1284, %v1286
        %v1288 = vadd.f32 %v1284, %v1287
        %vm1289 = vweird.f32 %v1262
        %vm1290 = vweird.f32 %v1284
        %vm1291 = vmor %vm1289, %vm1290
        %v1292 = vsel %vm1291, %v1284, %v1288
        %v1293 = vand.u32 2147483647, %v1262
        %vm1294 = vcmp.eq.f32.partialorder %v1293, 8.507059e+37
        %v1295 = vand.u32 %v1262, 2147483648
        %v1296 = vor.u32 1.1754944e-38, %v1295
        %v1297 = vsel %vm1294, %v1296, %v1292
        %v1298 = vmul.f32 1.0, %v1297
        %v1299 = vrcp.pop %v1263
        %v1300 = vmul.f32 %v1263, %v1299
        %v1301 = vsub.f32 1.0, %v1300
        %v1302 = vmul.f32 %v1299, %v1301
        %v1303 = vadd.f32 %v1299, %v1302
        %vm1304 = vweird.f32 %v1263
        %vm1305 = vweird.f32 %v1299
        %vm1306 = vmor %vm1304, %vm1305
        %v1307 = vsel %vm1306, %v1299, %v1303
        %v1308 = vand.u32 2147483647, %v1263
        %vm1309 = vcmp.eq.f32.partialorder %v1308, 8.507059e+37
        %v1310 = vand.u32 %v1263, 2147483648
        %v1311 = vor.u32 1.1754944e-38, %v1310
        %v1312 = vsel %vm1309, %v1311, %v1307
        %v1313 = vmul.f32 1.0, %v1312
        %v1314 = vrcp.pop %v1264
        %v1315 = vmul.f32 %v1264, %v1314
        %v1316 = vsub.f32 1.0, %v1315
        %v1317 = vmul.f32 %v1314, %v1316
        %v1318 = vadd.f32 %v1314, %v1317
        %vm1319 = vweird.f32 %v1264
        %vm1320 = vweird.f32 %v1314
        %vm1321 = vmor %vm1319, %vm1320
        %v1322 = vsel %vm1321, %v1314, %v1318
        %v1323 = vand.u32 2147483647, %v1264
        %vm1324 = vcmp.eq.f32.partialorder %v1323, 8.507059e+37
        %v1325 = vand.u32 %v1264, 2147483648
        %v1326 = vor.u32 1.1754944e-38, %v1325
        %v1327 = vsel %vm1324, %v1326, %v1322
        %v1328 = vmul.f32 1.0, %v1327
        %v1329 = vrcp.pop %v1265
        %v1330 = vmul.f32 %v1265, %v1329
        %v1331 = vsub.f32 1.0, %v1330
        %v1332 = vmul.f32 %v1329, %v1331
        %v1333 = vadd.f32 %v1329, %v1332
        %vm1334 = vweird.f32 %v1265
        %vm1335 = vweird.f32 %v1329
        %vm1336 = vmor %vm1334, %vm1335
        %v1337 = vsel %vm1336, %v1329, %v1333
        %v1338 = vand.u32 2147483647, %v1265
        %vm1339 = vcmp.eq.f32.partialorder %v1338, 8.507059e+37
        %v1340 = vand.u32 %v1265, 2147483648
        %v1341 = vor.u32 1.1754944e-38, %v1340
        %v1342 = vsel %vm1339, %v1341, %v1337
        %v1343 = vmul.f32 1.0, %v1342
        %v1344 = vrcp.pop %v1266
        %v1345 = vmul.f32 %v1266, %v1344
        %v1346 = vsub.f32 1.0, %v1345
        %v1347 = vmul.f32 %v1344, %v1346
        %v1348 = vadd.f32 %v1344, %v1347
        %vm1349 = vweird.f32 %v1266
        %vm1350 = vweird.f32 %v1344
        %vm1351 = vmor %vm1349, %vm1350
        %v1352 = vsel %vm1351, %v1344, %v1348
        %v1353 = vand.u32 2147483647, %v1266
        %vm1354 = vcmp.eq.f32.partialorder %v1353, 8.507059e+37
        %v1355 = vand.u32 %v1266, 2147483648
        %v1356 = vor.u32 1.1754944e-38, %v1355
        %v1357 = vsel %vm1354, %v1356, %v1352
        %v1358 = vmul.f32 1.0, %v1357
        %v1359 = vrcp.pop %v1267
        %v1360 = vmul.f32 %v1267, %v1359
        %v1361 = vsub.f32 1.0, %v1360
        %v1362 = vmul.f32 %v1359, %v1361
        %v1363 = vadd.f32 %v1359, %v1362
        %vm1364 = vweird.f32 %v1267
        %vm1365 = vweird.f32 %v1359
        %vm1366 = vmor %vm1364, %vm1365
        %v1367 = vsel %vm1366, %v1359, %v1363
        %v1368 = vand.u32 2147483647, %v1267
        %vm1369 = vcmp.eq.f32.partialorder %v1368, 8.507059e+37
        %v1370 = vand.u32 %v1267, 2147483648
        %v1371 = vor.u32 1.1754944e-38, %v1370
        %v1372 = vsel %vm1369, %v1371, %v1367
        %v1373 = vmul.f32 1.0, %v1372
        %v1374 = vrcp.pop %v1268
        %v1375 = vmul.f32 %v1268, %v1374
        %v1376 = vsub.f32 1.0, %v1375
        %v1377 = vmul.f32 %v1374, %v1376
        %v1378 = vadd.f32 %v1374, %v1377
        %vm1379 = vweird.f32 %v1268
        %vm1380 = vweird.f32 %v1374
        %vm1381 = vmor %vm1379, %vm1380
        %v1382 = vsel %vm1381, %v1374, %v1378
        %v1383 = vand.u32 2147483647, %v1268
        %vm1384 = vcmp.eq.f32.partialorder %v1383, 8.507059e+37
        %v1385 = vand.u32 %v1268, 2147483648
        %v1386 = vor.u32 1.1754944e-38, %v1385
        %v1387 = vsel %vm1384, %v1386, %v1382
        %v1388 = vmul.f32 1.0, %v1387
        %v1389 = vmul.f32 %v1283, %v1067
        %v1390 = vmul.f32 %v1298, %v1067
        %v1391 = vmul.f32 %v1313, %v1072
        %v1392 = vmul.f32 %v1328, %v1072
        %v1393 = vmul.f32 %v1343, %v1077
        %v1394 = vmul.f32 %v1358, %v1077
        %v1395 = vmul.f32 %v1373, %v1082
        %v1396 = vmul.f32 %v1388, %v1082
        %v1397 = vadd.f32 %v1389, %v349
        %v1398 = vadd.f32 %v1390, %v350
        %v1399 = vadd.f32 %v1391, %v351
        %v1400 = vadd.f32 %v1392, %v352
        %v1401 = vadd.f32 %v1393, %v353
        %v1402 = vadd.f32 %v1394, %v354
        %v1403 = vadd.f32 %v1395, %v355
        %v1404 = vadd.f32 %v1396, %v356
        %v1405 = vmax.f32 %v1397, 0.0
        %v1406 = vmax.f32 %v1398, 0.0
        %v1407 = vmax.f32 %v1399, 0.0
        %v1408 = vmax.f32 %v1400, 0.0
        %v1409 = vmax.f32 %v1401, 0.0
        %v1410 = vmax.f32 %v1402, 0.0
        %v1411 = vmax.f32 %v1403, 0.0
        %v1412 = vmax.f32 %v1404, 0.0
        %1413 = vst [vmem:[%s327] sm:$0xff] %v1405
        %1414 = vst [vmem:[%s327 + $0x8] sm:$0xff] %v1406
        %1415 = vst [vmem:[%s327 + $0x10] sm:$0xff] %v1407
        %1416 = vst [vmem:[%s327 + $0x18] sm:$0xff] %v1408
        %1417 = vst [vmem:[%s327 + $0x20] sm:$0xff] %v1409
        %1418 = vst [vmem:[%s327 + $0x28] sm:$0xff] %v1410
        %1419 = vst [vmem:[%s327 + $0x30] sm:$0xff] %v1411
        %1420 = vst [vmem:[%s327 + $0x38] sm:$0xff] %v1412
        %1421 = vst [vmem:[%s327 + $0x40] sm:$0xff] %v1405
        %1422 = vst [vmem:[%s327 + $0x48] sm:$0xff] %v1406
        %1423 = vst [vmem:[%s327 + $0x50] sm:$0xff] %v1407
        %1424 = vst [vmem:[%s327 + $0x58] sm:$0xff] %v1408
        %1425 = vst [vmem:[%s327 + $0x60] sm:$0xff] %v1409
        %1426 = vst [vmem:[%s327 + $0x68] sm:$0xff] %v1410
        %1427 = vst [vmem:[%s327 + $0x70] sm:$0xff] %v1411
        %1428 = vst [vmem:[%s327 + $0x78] sm:$0xff] %v1412
        %1429 = vst [vmem:[%s327 + $0x80] sm:$0xff] %v1405
        %1430 = vst [vmem:[%s327 + $0x88] sm:$0xff] %v1406
        %1431 = vst [vmem:[%s327 + $0x90] sm:$0xff] %v1407
        %1432 = vst [vmem:[%s327 + $0x98] sm:$0xff] %v1408
        %1433 = vst [vmem:[%s327 + $0xa0] sm:$0xff] %v1409
        %1434 = vst [vmem:[%s327 + $0xa8] sm:$0xff] %v1410
        %1435 = vst [vmem:[%s327 + $0xb0] sm:$0xff] %v1411
        %1436 = vst [vmem:[%s327 + $0xb8] sm:$0xff] %v1412
        %1437 = vst [vmem:[%s327 + $0xc0] sm:$0xff] %v1405
        %1438 = vst [vmem:[%s327 + $0xc8] sm:$0xff] %v1406
        %1439 = vst [vmem:[%s327 + $0xd0] sm:$0xff] %v1407
        %1440 = vst [vmem:[%s327 + $0xd8] sm:$0xff] %v1408
        %1441 = vst [vmem:[%s327 + $0xe0] sm:$0xff] %v1409
        %1442 = vst [vmem:[%s327 + $0xe8] sm:$0xff] %v1410
        %1443 = vst [vmem:[%s327 + $0xf0] sm:$0xff] %v1411
        %1444 = vst [vmem:[%s327 + $0xf8] sm:$0xff] %v1412
        %1445 = vst [vmem:[%s327 + $0x100] sm:$0xff] %v1405
        %1446 = vst [vmem:[%s327 + $0x108] sm:$0xff] %v1406
        %1447 = vst [vmem:[%s327 + $0x110] sm:$0xff] %v1407
        %1448 = vst [vmem:[%s327 + $0x118] sm:$0xff] %v1408
        %1449 = vst [vmem:[%s327 + $0x120] sm:$0xff] %v1409
        %1450 = vst [vmem:[%s327 + $0x128] sm:$0xff] %v1410
        %1451 = vst [vmem:[%s327 + $0x130] sm:$0xff] %v1411
        %1452 = vst [vmem:[%s327 + $0x138] sm:$0xff] %v1412
        %1453 = vst [vmem:[%s327 + $0x140] sm:$0xff] %v1405
        %1454 = vst [vmem:[%s327 + $0x148] sm:$0xff] %v1406
        %1455 = vst [vmem:[%s327 + $0x150] sm:$0xff] %v1407
        %1456 = vst [vmem:[%s327 + $0x158] sm:$0xff] %v1408
        %1457 = vst [vmem:[%s327 + $0x160] sm:$0xff] %v1409
        %1458 = vst [vmem:[%s327 + $0x168] sm:$0xff] %v1410
        %1459 = vst [vmem:[%s327 + $0x170] sm:$0xff] %v1411
        %1460 = vst [vmem:[%s327 + $0x178] sm:$0xff] %v1412
        %v1461 = vmul.f32 %v1283, %v760
        %v1462 = vmul.f32 %v1298, %v885
        %v1463 = vmul.f32 %v1313, %v763
        %v1464 = vmul.f32 %v1328, %v888
        %v1465 = vmul.f32 %v1343, %v766
        %v1466 = vmul.f32 %v1358, %v891
        %v1467 = vmul.f32 %v1373, %v769
        %v1468 = vmul.f32 %v1388, %v894
        %v1469 = vadd.f32 %v1461, %v1397
        %v1470 = vadd.f32 %v1462, %v1398
        %v1471 = vadd.f32 %v1463, %v1399
        %v1472 = vadd.f32 %v1464, %v1400
        %v1473 = vadd.f32 %v1465, %v1401
        %v1474 = vadd.f32 %v1466, %v1402
        %v1475 = vadd.f32 %v1467, %v1403
        %v1476 = vadd.f32 %v1468, %v1404
        %v1477 = vmax.f32 %v1469, 0.0
        %v1478 = vmax.f32 %v1470, 0.0
        %v1479 = vmax.f32 %v1471, 0.0
        %v1480 = vmax.f32 %v1472, 0.0
        %v1481 = vmax.f32 %v1473, 0.0
        %v1482 = vmax.f32 %v1474, 0.0
        %v1483 = vmax.f32 %v1475, 0.0
        %v1484 = vmax.f32 %v1476, 0.0
        %1485 = vst [vmem:[%s327 + $0x180] sm:$0xff] %v1477
        %1486 = vst [vmem:[%s327 + $0x188] sm:$0xff] %v1478
        %1487 = vst [vmem:[%s327 + $0x190] sm:$0xff] %v1479
        %1488 = vst [vmem:[%s327 + $0x198] sm:$0xff] %v1480
        %1489 = vst [vmem:[%s327 + $0x1a0] sm:$0xff] %v1481
        %1490 = vst [vmem:[%s327 + $0x1a8] sm:$0xff] %v1482
        %1491 = vst [vmem:[%s327 + $0x1b0] sm:$0xff] %v1483
        %1492 = vst [vmem:[%s327 + $0x1b8] sm:$0xff] %v1484
        %v1493 = vmul.f32 %v1283, %v772
        %v1494 = vmul.f32 %v1298, %v897
        %v1495 = vmul.f32 %v1313, %v775
        %v1496 = vmul.f32 %v1328, %v900
        %v1497 = vmul.f32 %v1343, %v778
        %v1498 = vmul.f32 %v1358, %v903
        %v1499 = vmul.f32 %v1373, %v781
        %v1500 = vmul.f32 %v1388, %v906
        %v1501 = vadd.f32 %v1493, %v1397
        %v1502 = vadd.f32 %v1494, %v1398
        %v1503 = vadd.f32 %v1495, %v1399
        %v1504 = vadd.f32 %v1496, %v1400
        %v1505 = vadd.f32 %v1497, %v1401
        %v1506 = vadd.f32 %v1498, %v1402
        %v1507 = vadd.f32 %v1499, %v1403
        %v1508 = vadd.f32 %v1500, %v1404
        %v1509 = vmax.f32 %v1501, 0.0
        %v1510 = vmax.f32 %v1502, 0.0
        %v1511 = vmax.f32 %v1503, 0.0
        %v1512 = vmax.f32 %v1504, 0.0
        %v1513 = vmax.f32 %v1505, 0.0
        %v1514 = vmax.f32 %v1506, 0.0
        %v1515 = vmax.f32 %v1507, 0.0
        %v1516 = vmax.f32 %v1508, 0.0
        %1517 = vst [vmem:[%s327 + $0x1c0] sm:$0xff] %v1509
        %1518 = vst [vmem:[%s327 + $0x1c8] sm:$0xff] %v1510
        %1519 = vst [vmem:[%s327 + $0x1d0] sm:$0xff] %v1511
        %1520 = vst [vmem:[%s327 + $0x1d8] sm:$0xff] %v1512
        %1521 = vst [vmem:[%s327 + $0x1e0] sm:$0xff] %v1513
        %1522 = vst [vmem:[%s327 + $0x1e8] sm:$0xff] %v1514
        %1523 = vst [vmem:[%s327 + $0x1f0] sm:$0xff] %v1515
        %1524 = vst [vmem:[%s327 + $0x1f8] sm:$0xff] %v1516
        %v1525 = vmul.f32 %v1283, %v784
        %v1526 = vmul.f32 %v1298, %v909
        %v1527 = vmul.f32 %v1313, %v787
        %v1528 = vmul.f32 %v1328, %v912
        %v1529 = vmul.f32 %v1343, %v790
        %v1530 = vmul.f32 %v1358, %v915
        %v1531 = vmul.f32 %v1373, %v793
        %v1532 = vmul.f32 %v1388, %v918
        %v1533 = vadd.f32 %v1525, %v1397
        %v1534 = vadd.f32 %v1526, %v1398
        %v1535 = vadd.f32 %v1527, %v1399
        %v1536 = vadd.f32 %v1528, %v1400
        %v1537 = vadd.f32 %v1529, %v1401
        %v1538 = vadd.f32 %v1530, %v1402
        %v1539 = vadd.f32 %v1531, %v1403
        %v1540 = vadd.f32 %v1532, %v1404
        %v1541 = vmax.f32 %v1533, 0.0
        %v1542 = vmax.f32 %v1534, 0.0
        %v1543 = vmax.f32 %v1535, 0.0
        %v1544 = vmax.f32 %v1536, 0.0
        %v1545 = vmax.f32 %v1537, 0.0
        %v1546 = vmax.f32 %v1538, 0.0
        %v1547 = vmax.f32 %v1539, 0.0
        %v1548 = vmax.f32 %v1540, 0.0
        %1549 = vst [vmem:[%s327 + $0x200] sm:$0xff] %v1541
        %1550 = vst [vmem:[%s327 + $0x208] sm:$0xff] %v1542
        %1551 = vst [vmem:[%s327 + $0x210] sm:$0xff] %v1543
        %1552 = vst [vmem:[%s327 + $0x218] sm:$0xff] %v1544
        %1553 = vst [vmem:[%s327 + $0x220] sm:$0xff] %v1545
        %1554 = vst [vmem:[%s327 + $0x228] sm:$0xff] %v1546
        %1555 = vst [vmem:[%s327 + $0x230] sm:$0xff] %v1547
        %1556 = vst [vmem:[%s327 + $0x238] sm:$0xff] %v1548
        %1557 = vst [vmem:[%s327 + $0x240] sm:$0xff] %v1405
        %1558 = vst [vmem:[%s327 + $0x248] sm:$0xff] %v1406
        %1559 = vst [vmem:[%s327 + $0x250] sm:$0xff] %v1407
        %1560 = vst [vmem:[%s327 + $0x258] sm:$0xff] %v1408
        %1561 = vst [vmem:[%s327 + $0x260] sm:$0xff] %v1409
        %1562 = vst [vmem:[%s327 + $0x268] sm:$0xff] %v1410
        %1563 = vst [vmem:[%s327 + $0x270] sm:$0xff] %v1411
        %1564 = vst [vmem:[%s327 + $0x278] sm:$0xff] %v1412
        %1565 = vst [vmem:[%s327 + $0x280] sm:$0xff] %v1405
        %1566 = vst [vmem:[%s327 + $0x288] sm:$0xff] %v1406
        %1567 = vst [vmem:[%s327 + $0x290] sm:$0xff] %v1407
        %1568 = vst [vmem:[%s327 + $0x298] sm:$0xff] %v1408
        %1569 = vst [vmem:[%s327 + $0x2a0] sm:$0xff] %v1409
        %1570 = vst [vmem:[%s327 + $0x2a8] sm:$0xff] %v1410
        %1571 = vst [vmem:[%s327 + $0x2b0] sm:$0xff] %v1411
        %1572 = vst [vmem:[%s327 + $0x2b8] sm:$0xff] %v1412
        %v1573 = vmul.f32 %v1283, %v796
        %v1574 = vmul.f32 %v1298, %v921
        %v1575 = vmul.f32 %v1313, %v799
        %v1576 = vmul.f32 %v1328, %v924
        %v1577 = vmul.f32 %v1343, %v802
        %v1578 = vmul.f32 %v1358, %v927
        %v1579 = vmul.f32 %v1373, %v805
        %v1580 = vmul.f32 %v1388, %v930
        %v1581 = vadd.f32 %v1573, %v1397
        %v1582 = vadd.f32 %v1574, %v1398
        %v1583 = vadd.f32 %v1575, %v1399
        %v1584 = vadd.f32 %v1576, %v1400
        %v1585 = vadd.f32 %v1577, %v1401
        %v1586 = vadd.f32 %v1578, %v1402
        %v1587 = vadd.f32 %v1579, %v1403
        %v1588 = vadd.f32 %v1580, %v1404
        %v1589 = vmax.f32 %v1581, 0.0
        %v1590 = vmax.f32 %v1582, 0.0
        %v1591 = vmax.f32 %v1583, 0.0
        %v1592 = vmax.f32 %v1584, 0.0
        %v1593 = vmax.f32 %v1585, 0.0
        %v1594 = vmax.f32 %v1586, 0.0
        %v1595 = vmax.f32 %v1587, 0.0
        %v1596 = vmax.f32 %v1588, 0.0
        %1597 = vst [vmem:[%s327 + $0x2c0] sm:$0xff] %v1589
        %1598 = vst [vmem:[%s327 + $0x2c8] sm:$0xff] %v1590
        %1599 = vst [vmem:[%s327 + $0x2d0] sm:$0xff] %v1591
        %1600 = vst [vmem:[%s327 + $0x2d8] sm:$0xff] %v1592
        %1601 = vst [vmem:[%s327 + $0x2e0] sm:$0xff] %v1593
        %1602 = vst [vmem:[%s327 + $0x2e8] sm:$0xff] %v1594
        %1603 = vst [vmem:[%s327 + $0x2f0] sm:$0xff] %v1595
        %1604 = vst [vmem:[%s327 + $0x2f8] sm:$0xff] %v1596
        %v1605 = vmul.f32 %v1283, %v808
        %v1606 = vmul.f32 %v1298, %v933
        %v1607 = vmul.f32 %v1313, %v811
        %v1608 = vmul.f32 %v1328, %v936
        %v1609 = vmul.f32 %v1343, %v814
        %v1610 = vmul.f32 %v1358, %v939
        %v1611 = vmul.f32 %v1373, %v817
        %v1612 = vmul.f32 %v1388, %v942
        %v1613 = vadd.f32 %v1605, %v1397
        %v1614 = vadd.f32 %v1606, %v1398
        %v1615 = vadd.f32 %v1607, %v1399
        %v1616 = vadd.f32 %v1608, %v1400
        %v1617 = vadd.f32 %v1609, %v1401
        %v1618 = vadd.f32 %v1610, %v1402
        %v1619 = vadd.f32 %v1611, %v1403
        %v1620 = vadd.f32 %v1612, %v1404
        %v1621 = vmax.f32 %v1613, 0.0
        %v1622 = vmax.f32 %v1614, 0.0
        %v1623 = vmax.f32 %v1615, 0.0
        %v1624 = vmax.f32 %v1616, 0.0
        %v1625 = vmax.f32 %v1617, 0.0
        %v1626 = vmax.f32 %v1618, 0.0
        %v1627 = vmax.f32 %v1619, 0.0
        %v1628 = vmax.f32 %v1620, 0.0
        %1629 = vst [vmem:[%s327 + $0x300] sm:$0xff] %v1621
        %1630 = vst [vmem:[%s327 + $0x308] sm:$0xff] %v1622
        %1631 = vst [vmem:[%s327 + $0x310] sm:$0xff] %v1623
        %1632 = vst [vmem:[%s327 + $0x318] sm:$0xff] %v1624
        %1633 = vst [vmem:[%s327 + $0x320] sm:$0xff] %v1625
        %1634 = vst [vmem:[%s327 + $0x328] sm:$0xff] %v1626
        %1635 = vst [vmem:[%s327 + $0x330] sm:$0xff] %v1627
        %1636 = vst [vmem:[%s327 + $0x338] sm:$0xff] %v1628
        %v1637 = vmul.f32 %v1283, %v820
        %v1638 = vmul.f32 %v1298, %v945
        %v1639 = vmul.f32 %v1313, %v823
        %v1640 = vmul.f32 %v1328, %v948
        %v1641 = vmul.f32 %v1343, %v826
        %v1642 = vmul.f32 %v1358, %v951
        %v1643 = vmul.f32 %v1373, %v829
        %v1644 = vmul.f32 %v1388, %v954
        %v1645 = vadd.f32 %v1637, %v1397
        %v1646 = vadd.f32 %v1638, %v1398
        %v1647 = vadd.f32 %v1639, %v1399
        %v1648 = vadd.f32 %v1640, %v1400
        %v1649 = vadd.f32 %v1641, %v1401
        %v1650 = vadd.f32 %v1642, %v1402
        %v1651 = vadd.f32 %v1643, %v1403
        %v1652 = vadd.f32 %v1644, %v1404
        %v1653 = vmax.f32 %v1645, 0.0
        %v1654 = vmax.f32 %v1646, 0.0
        %v1655 = vmax.f32 %v1647, 0.0
        %v1656 = vmax.f32 %v1648, 0.0
        %v1657 = vmax.f32 %v1649, 0.0
        %v1658 = vmax.f32 %v1650, 0.0
        %v1659 = vmax.f32 %v1651, 0.0
        %v1660 = vmax.f32 %v1652, 0.0
        %1661 = vst [vmem:[%s327 + $0x340] sm:$0xff] %v1653
        %1662 = vst [vmem:[%s327 + $0x348] sm:$0xff] %v1654
        %1663 = vst [vmem:[%s327 + $0x350] sm:$0xff] %v1655
        %1664 = vst [vmem:[%s327 + $0x358] sm:$0xff] %v1656
        %1665 = vst [vmem:[%s327 + $0x360] sm:$0xff] %v1657
        %1666 = vst [vmem:[%s327 + $0x368] sm:$0xff] %v1658
        %1667 = vst [vmem:[%s327 + $0x370] sm:$0xff] %v1659
        %1668 = vst [vmem:[%s327 + $0x378] sm:$0xff] %v1660
        %1669 = vst [vmem:[%s327 + $0x380] sm:$0xff] %v1405
        %1670 = vst [vmem:[%s327 + $0x388] sm:$0xff] %v1406
        %1671 = vst [vmem:[%s327 + $0x390] sm:$0xff] %v1407
        %1672 = vst [vmem:[%s327 + $0x398] sm:$0xff] %v1408
        %1673 = vst [vmem:[%s327 + $0x3a0] sm:$0xff] %v1409
        %1674 = vst [vmem:[%s327 + $0x3a8] sm:$0xff] %v1410
        %1675 = vst [vmem:[%s327 + $0x3b0] sm:$0xff] %v1411
        %1676 = vst [vmem:[%s327 + $0x3b8] sm:$0xff] %v1412
        %1677 = vst [vmem:[%s327 + $0x3c0] sm:$0xff] %v1405
        %1678 = vst [vmem:[%s327 + $0x3c8] sm:$0xff] %v1406
        %1679 = vst [vmem:[%s327 + $0x3d0] sm:$0xff] %v1407
        %1680 = vst [vmem:[%s327 + $0x3d8] sm:$0xff] %v1408
        %1681 = vst [vmem:[%s327 + $0x3e0] sm:$0xff] %v1409
        %1682 = vst [vmem:[%s327 + $0x3e8] sm:$0xff] %v1410
        %1683 = vst [vmem:[%s327 + $0x3f0] sm:$0xff] %v1411
        %1684 = vst [vmem:[%s327 + $0x3f8] sm:$0xff] %v1412
        %v1685 = vmul.f32 %v1283, %v832
        %v1686 = vmul.f32 %v1298, %v957
        %v1687 = vmul.f32 %v1313, %v835
        %v1688 = vmul.f32 %v1328, %v960
        %v1689 = vmul.f32 %v1343, %v838
        %v1690 = vmul.f32 %v1358, %v963
        %v1691 = vmul.f32 %v1373, %v841
        %v1692 = vmul.f32 %v1388, %v966
        %v1693 = vadd.f32 %v1685, %v1397
        %v1694 = vadd.f32 %v1686, %v1398
        %v1695 = vadd.f32 %v1687, %v1399
        %v1696 = vadd.f32 %v1688, %v1400
        %v1697 = vadd.f32 %v1689, %v1401
        %v1698 = vadd.f32 %v1690, %v1402
        %v1699 = vadd.f32 %v1691, %v1403
        %v1700 = vadd.f32 %v1692, %v1404
        %v1701 = vmax.f32 %v1693, 0.0
        %v1702 = vmax.f32 %v1694, 0.0
        %v1703 = vmax.f32 %v1695, 0.0
        %v1704 = vmax.f32 %v1696, 0.0
        %v1705 = vmax.f32 %v1697, 0.0
        %v1706 = vmax.f32 %v1698, 0.0
        %v1707 = vmax.f32 %v1699, 0.0
        %v1708 = vmax.f32 %v1700, 0.0
        %1709 = vst [vmem:[%s327 + $0x400] sm:$0xff] %v1701
        %1710 = vst [vmem:[%s327 + $0x408] sm:$0xff] %v1702
        %1711 = vst [vmem:[%s327 + $0x410] sm:$0xff] %v1703
        %1712 = vst [vmem:[%s327 + $0x418] sm:$0xff] %v1704
        %1713 = vst [vmem:[%s327 + $0x420] sm:$0xff] %v1705
        %1714 = vst [vmem:[%s327 + $0x428] sm:$0xff] %v1706
        %1715 = vst [vmem:[%s327 + $0x430] sm:$0xff] %v1707
        %1716 = vst [vmem:[%s327 + $0x438] sm:$0xff] %v1708
        %v1717 = vmul.f32 %v1283, %v844
        %v1718 = vmul.f32 %v1298, %v969
        %v1719 = vmul.f32 %v1313, %v847
        %v1720 = vmul.f32 %v1328, %v972
        %v1721 = vmul.f32 %v1343, %v850
        %v1722 = vmul.f32 %v1358, %v975
        %v1723 = vmul.f32 %v1373, %v853
        %v1724 = vmul.f32 %v1388, %v978
        %v1725 = vadd.f32 %v1717, %v1397
        %v1726 = vadd.f32 %v1718, %v1398
        %v1727 = vadd.f32 %v1719, %v1399
        %v1728 = vadd.f32 %v1720, %v1400
        %v1729 = vadd.f32 %v1721, %v1401
        %v1730 = vadd.f32 %v1722, %v1402
        %v1731 = vadd.f32 %v1723, %v1403
        %v1732 = vadd.f32 %v1724, %v1404
        %v1733 = vmax.f32 %v1725, 0.0
        %v1734 = vmax.f32 %v1726, 0.0
        %v1735 = vmax.f32 %v1727, 0.0
        %v1736 = vmax.f32 %v1728, 0.0
        %v1737 = vmax.f32 %v1729, 0.0
        %v1738 = vmax.f32 %v1730, 0.0
        %v1739 = vmax.f32 %v1731, 0.0
        %v1740 = vmax.f32 %v1732, 0.0
        %1741 = vst [vmem:[%s327 + $0x440] sm:$0xff] %v1733
        %1742 = vst [vmem:[%s327 + $0x448] sm:$0xff] %v1734
        %1743 = vst [vmem:[%s327 + $0x450] sm:$0xff] %v1735
        %1744 = vst [vmem:[%s327 + $0x458] sm:$0xff] %v1736
        %1745 = vst [vmem:[%s327 + $0x460] sm:$0xff] %v1737
        %1746 = vst [vmem:[%s327 + $0x468] sm:$0xff] %v1738
        %1747 = vst [vmem:[%s327 + $0x470] sm:$0xff] %v1739
        %1748 = vst [vmem:[%s327 + $0x478] sm:$0xff] %v1740
        %v1749 = vmul.f32 %v1283, %v856
        %v1750 = vmul.f32 %v1298, %v981
        %v1751 = vmul.f32 %v1313, %v859
        %v1752 = vmul.f32 %v1328, %v984
        %v1753 = vmul.f32 %v1343, %v862
        %v1754 = vmul.f32 %v1358, %v987
        %v1755 = vmul.f32 %v1373, %v865
        %v1756 = vmul.f32 %v1388, %v990
        %v1757 = vadd.f32 %v1749, %v1397
        %v1758 = vadd.f32 %v1750, %v1398
        %v1759 = vadd.f32 %v1751, %v1399
        %v1760 = vadd.f32 %v1752, %v1400
        %v1761 = vadd.f32 %v1753, %v1401
        %v1762 = vadd.f32 %v1754, %v1402
        %v1763 = vadd.f32 %v1755, %v1403
        %v1764 = vadd.f32 %v1756, %v1404
        %v1765 = vmax.f32 %v1757, 0.0
        %v1766 = vmax.f32 %v1758, 0.0
        %v1767 = vmax.f32 %v1759, 0.0
        %v1768 = vmax.f32 %v1760, 0.0
        %v1769 = vmax.f32 %v1761, 0.0
        %v1770 = vmax.f32 %v1762, 0.0
        %v1771 = vmax.f32 %v1763, 0.0
        %v1772 = vmax.f32 %v1764, 0.0
        %1773 = vst [vmem:[%s327 + $0x480] sm:$0xff] %v1765
        %1774 = vst [vmem:[%s327 + $0x488] sm:$0xff] %v1766
        %1775 = vst [vmem:[%s327 + $0x490] sm:$0xff] %v1767
        %1776 = vst [vmem:[%s327 + $0x498] sm:$0xff] %v1768
        %1777 = vst [vmem:[%s327 + $0x4a0] sm:$0xff] %v1769
        %1778 = vst [vmem:[%s327 + $0x4a8] sm:$0xff] %v1770
        %1779 = vst [vmem:[%s327 + $0x4b0] sm:$0xff] %v1771
        %1780 = vst [vmem:[%s327 + $0x4b8] sm:$0xff] %v1772
        %1781 = vst [vmem:[%s327 + $0x4c0] sm:$0xff] %v1405
        %1782 = vst [vmem:[%s327 + $0x4c8] sm:$0xff] %v1406
        %1783 = vst [vmem:[%s327 + $0x4d0] sm:$0xff] %v1407
        %1784 = vst [vmem:[%s327 + $0x4d8] sm:$0xff] %v1408
        %1785 = vst [vmem:[%s327 + $0x4e0] sm:$0xff] %v1409
        %1786 = vst [vmem:[%s327 + $0x4e8] sm:$0xff] %v1410
        %1787 = vst [vmem:[%s327 + $0x4f0] sm:$0xff] %v1411
        %1788 = vst [vmem:[%s327 + $0x4f8] sm:$0xff] %v1412
        %1789 = vst [vmem:[%s327 + $0x500] sm:$0xff] %v1405
        %1790 = vst [vmem:[%s327 + $0x508] sm:$0xff] %v1406
        %1791 = vst [vmem:[%s327 + $0x510] sm:$0xff] %v1407
        %1792 = vst [vmem:[%s327 + $0x518] sm:$0xff] %v1408
        %1793 = vst [vmem:[%s327 + $0x520] sm:$0xff] %v1409
        %1794 = vst [vmem:[%s327 + $0x528] sm:$0xff] %v1410
        %1795 = vst [vmem:[%s327 + $0x530] sm:$0xff] %v1411
        %1796 = vst [vmem:[%s327 + $0x538] sm:$0xff] %v1412
        %1797 = vst [vmem:[%s327 + $0x540] sm:$0xff] %v1405
        %1798 = vst [vmem:[%s327 + $0x548] sm:$0xff] %v1406
        %1799 = vst [vmem:[%s327 + $0x550] sm:$0xff] %v1407
        %1800 = vst [vmem:[%s327 + $0x558] sm:$0xff] %v1408
        %1801 = vst [vmem:[%s327 + $0x560] sm:$0xff] %v1409
        %1802 = vst [vmem:[%s327 + $0x568] sm:$0xff] %v1410
        %1803 = vst [vmem:[%s327 + $0x570] sm:$0xff] %v1411
        %1804 = vst [vmem:[%s327 + $0x578] sm:$0xff] %v1412
        %1805 = vst [vmem:[%s327 + $0x580] sm:$0xff] %v1405
        %1806 = vst [vmem:[%s327 + $0x588] sm:$0xff] %v1406
        %1807 = vst [vmem:[%s327 + $0x590] sm:$0xff] %v1407
        %1808 = vst [vmem:[%s327 + $0x598] sm:$0xff] %v1408
        %1809 = vst [vmem:[%s327 + $0x5a0] sm:$0xff] %v1409
        %1810 = vst [vmem:[%s327 + $0x5a8] sm:$0xff] %v1410
        %1811 = vst [vmem:[%s327 + $0x5b0] sm:$0xff] %v1411
        %1812 = vst [vmem:[%s327 + $0x5b8] sm:$0xff] %v1412
        %1813 = vst [vmem:[%s327 + $0x5c0] sm:$0xff] %v1405
        %1814 = vst [vmem:[%s327 + $0x5c8] sm:$0xff] %v1406
        %1815 = vst [vmem:[%s327 + $0x5d0] sm:$0xff] %v1407
        %1816 = vst [vmem:[%s327 + $0x5d8] sm:$0xff] %v1408
        %1817 = vst [vmem:[%s327 + $0x5e0] sm:$0xff] %v1409
        %1818 = vst [vmem:[%s327 + $0x5e8] sm:$0xff] %v1410
        %1819 = vst [vmem:[%s327 + $0x5f0] sm:$0xff] %v1411
        %1820 = vst [vmem:[%s327 + $0x5f8] sm:$0xff] %v1412
        %1821 = vst [vmem:[%s327 + $0x600] sm:$0xff] %v1405
        %1822 = vst [vmem:[%s327 + $0x608] sm:$0xff] %v1406
        %1823 = vst [vmem:[%s327 + $0x610] sm:$0xff] %v1407
        %1824 = vst [vmem:[%s327 + $0x618] sm:$0xff] %v1408
        %1825 = vst [vmem:[%s327 + $0x620] sm:$0xff] %v1409
        %1826 = vst [vmem:[%s327 + $0x628] sm:$0xff] %v1410
        %1827 = vst [vmem:[%s327 + $0x630] sm:$0xff] %v1411
        %1828 = vst [vmem:[%s327 + $0x638] sm:$0xff] %v1412
        %s1829 = sand.u32 %s185, 1
        %s1830 = scalar_lea.sflag [#allocation4], %s1829
        %s1831 = sand.u32 %s185, 1
        %s1832 = smul.addr %s1831, 1600
        %s1833 = scalar_lea.vmem [#allocation8], %s1832
        // Predicated region
        $region61: #{tpu_custom_call.1} parent=47 // pred_check
          %p1834 = pneg %p195
        $region62: #{tpu_custom_call.1} parent=47 // pred_check_branch
          %1836 = sbr.rel (%p1834) target = $region64
        $region63: #{tpu_custom_call.1} parent=47 // pred_region
          %s1837 = smul.u32 2, %s25
          %1839 = vsyncadd %s1830, 0
          %s1840 = smul.addr %s1837, 8
          %s1841 = scalar_lea.hbm %s7, %s1840
          %s1842 = sshll.u32 %s1833, 4
          %s1843 = int_to_ptr.vmem [resolvable:$true] %s1842
          %s1844 = sshll.u32 %s1841, 4
          %s1845 = int_to_ptr.hbm [resolvable:$true] %s1844
          %1850 = dma.vmem_to_hbm [thread:$0]  %s1843, 25600, %s1845, %s1830, 256, 512, 16
        $region64: #{tpu_custom_call.1} parent=47 // pred_fallthru
          _
      $region48: #{tpu_custom_call.1} parent=5 // pred_fallthru
        _
      %p1851 = scmp.le.s32.totalorder 2, %s20
      // Predicated region
      $region65: #{tpu_custom_call.1} parent=5 // pred_check
        %p1852 = pneg %p1851
      $region66: #{tpu_custom_call.1} parent=5 // pred_check_branch
        %1854 = sbr.rel (%p1852) target = $region68
      $region67: #{tpu_custom_call.1} parent=5 // pred_region
        %s1855 = ssub.s32 %s20, 2
        // Predicated region
        $region69: #{tpu_custom_call.1} parent=67 // pred_check
          %p1856 = pneg %p201
        $region70: #{tpu_custom_call.1} parent=67 // pred_check_branch
          %1858 = sbr.rel (%p1856) target = $region72
        $region71: #{tpu_custom_call.1} parent=67 // pred_region
          %s1859 = sand.u32 %s186, 1
          %s1860 = scalar_lea.sflag [#allocation4], %s1859
          %s1861 = sand.u32 %s186, 1
          %s1862 = smul.addr %s1861, 1600
          %s1863 = scalar_lea.vmem [#allocation8], %s1862
          %1865 = dma.done %s1860, 25600
        $region72: #{tpu_custom_call.1} parent=67 // pred_fallthru
          _
      $region68: #{tpu_custom_call.1} parent=5 // pred_fallthru
        _
    $region6: #{tpu_custom_call.1} parent=1 // loop_footer
      %s24 = sadd.s32 1, %s20
    $region7: #{tpu_custom_call.1} parent=1 // loop_footer_branch
      %19 = sbr.rel target = $region3
    $region8: #{tpu_custom_call.1} parent=1 // loop_exit
      _
    %1866 = vsyncpa [#allocation3], 1
    %s1867 = scalar_lea.sflag [#allocation3], 1
    %1868 = vsyncpa %s1867, 1
    %1869 = vsyncpa [#allocation6], 1
    %1870 = vsyncpa [#allocation4], 1
    %s1871 = scalar_lea.sflag [#allocation4], 1
    %1872 = vsyncpa %s1871, 1

</llo_original>
